<compile_context>
chip_gen: v5e
topology: v5e:2x2
jax: 0.10.0
libtpu: 0.0.40
codegen_flags: <defaults>
</compile_context>

<pallas_src>
import jax
import jax.numpy as jnp
from jax import lax
from jax.experimental import pallas as pl
from jax.experimental.pallas import tpu as pltpu

L_IN = 250        # input signal length implied by fc1 = Linear(32*62, 64)
C1 = 16
C2 = 32
K = 5
P1 = 125          # after pool1
P2 = 62           # after pool2
HID = 64
OUT = 4
OUT_PAD = 128     # fc2 outputs padded to a full lane tile -> unmasked stores

NTB = 16          # time blocks per sample (8 conv2 outputs each)
WIN = 36          # raw-input window per time block (covers 16 pooled + conv halos)
W1_ROWS = 64      # window lanes: 36 data + 1 ones + 3 indicators + pad
N1 = 2 * 16 * C1  # conv1 block columns: (parity, window pos dt, channel) = 512
N2 = 2 * 4 * C2   # conv2 block columns: (parity, pooled offset j', channel) = 256
FLAT = NTB * 4 * C2  # flattened features per sample (64 pooled slots x 32 ch) = 2048
NEG = -1.0e9      # "force to zero through ReLU" constant for invalid conv positions


def _round_up(a, b):
    return ((a + b - 1) // b) * b


def ppg_cnn_kernel(lhs1_ref,   # (Bb*16, 64)  bf16 per-(sample, time-block) input windows
                   w1_ref,     # (64, 512)    bf16 conv1 per-window weight block
                   w2_ref,     # (256, 256)   bf16 conv2 per-window weight block
                   b2_ref,     # (1, 128)     f32  conv2 bias tiled over pooled offsets
                   wf1_ref,    # (2048, 64)   bf16 fc1 weight (zero rows for pad slots)
                   bf1_ref,    # (1, 64)      f32
                   wf2_ref,    # (64, 128)    bf16 fc2 weight zero-padded 4 -> 128
                   bf2_ref,    # (1, 128)     f32
                   out_ref):   # (Bb, 128)    f32
    Bb = out_ref.shape[0]

    # ---- conv1 (+bias, +boundary zeroing) as one MXU matmul over shared windows ----
    y1 = jnp.dot(lhs1_ref[...], w1_ref[...],
                 preferred_element_type=jnp.float32)            # (Bb*16, 512)

    # ---- fused ReLU + MaxPool1d(2): parity halves are lane-tile aligned ----
    p1 = jnp.maximum(jnp.maximum(y1[:, :256], y1[:, 256:]), 0.0)  # (Bb*16, 256)

    # ---- conv2 as one MXU matmul: (window pos, ch) -> (parity, pooled offset, ch) ----
    y2 = jnp.dot(p1.astype(jnp.bfloat16), w2_ref[...],
                 preferred_element_type=jnp.float32)            # (Bb*16, 256)

    # ---- conv2 bias (same for both parities) + fused ReLU + MaxPool1d(2) ----
    p2 = jnp.maximum(jnp.maximum(y2[:, :128], y2[:, 128:]) + b2_ref[...], 0.0)

    # ---- flatten 16 time blocks into per-sample feature rows (single relayout) ----
    flat = p2.reshape(Bb, NTB * 128).astype(jnp.bfloat16)       # (Bb, 2048)

    # ---- fc1 + ReLU, fc2 into padded lanes ----
    h = jnp.dot(flat, wf1_ref[...], preferred_element_type=jnp.float32) + bf1_ref[...]
    h = jnp.maximum(h, 0.0)
    # TODO(synk): nn.Dropout(0.3) is identity here (eval-mode semantics).
    out = jnp.dot(h.astype(jnp.bfloat16), wf2_ref[...],
                  preferred_element_type=jnp.float32) + bf2_ref[...]
    out_ref[...] = out.astype(out_ref.dtype)


def ppg_cnn_forward(x, params):
    """x: (B, 1, 250) float32 (NCL, like the PyTorch module). Returns (B, 4)."""
    conv1_w, conv1_b, conv2_w, conv2_b, fc1_w, fc1_b, fc2_w, fc2_b = params
    B = x.shape[0]
    assert x.shape == (B, 1, L_IN)

    # ---- batch blocking: up to 128 samples per block, >=2 blocks when batch allows ----
    B_r = _round_up(max(B, 1), 8)
    if B_r >= 256:
        B_blk = 128
    elif B_r >= 16:
        B_blk = _round_up(B_r // 2, 8)
    else:
        B_blk = 8
    B_pad = _round_up(B_r, B_blk)
    nb = B_pad // B_blk

    f32 = jnp.float32
    bf16 = jnp.bfloat16

    # ---------------- input: per-(sample, time-block) raw windows ----------------
    # Window tb lane r holds x[16*tb + r - 6] (zero outside [0, 250)); lane 36 = 1.0
    # (bias), lanes 37/38/39 = indicators for tb==0/14/15 (boundary masking).
    x_nl = x[:, 0, :]                                              # (B, 250)
    x_nl = jnp.pad(x_nl, ((0, B_pad - B), (0, 0)))                 # (B_pad, 250)
    xp = jnp.pad(x_nl, ((0, 0), (6, 26)))                          # (B_pad, 282)
    wins = jnp.stack([xp[:, 16 * t: 16 * t + WIN] for t in range(NTB)], axis=1)
    ones = jnp.ones((B_pad, NTB, 1), f32)
    ind = jnp.zeros((NTB, 3), f32).at[0, 0].set(1.0).at[14, 1].set(1.0).at[15, 2].set(1.0)
    ind = jnp.broadcast_to(ind[None], (B_pad, NTB, 3))
    tail = jnp.zeros((B_pad, NTB, W1_ROWS - (WIN + 4)), f32)
    lhs1 = jnp.concatenate([wins, ones, ind, tail], axis=-1)       # (B_pad, 16, 64)
    lhs1 = lhs1.reshape(B_pad * NTB, W1_ROWS).astype(bf16)

    # ---------------- conv1 per-window weight block (shared across tb) ----------------
    # Column (p, dt, c) = conv1 output at time tau = 16*tb + 2*dt + p - 4, channel c.
    # Data rows: r = 2*dt + p + k <- w1[k, c];  row 36 <- bias;  rows 37-39 <- -1e9
    # at the (dt) positions whose pooled time falls outside [0, 125) for that tb.
    w1_kc = jnp.transpose(conv1_w[:, 0, :], (1, 0))                # (K, C1)
    W1 = jnp.zeros((W1_ROWS, 2, 16, C1), f32)
    dt = jnp.arange(16)
    for p in range(2):
        for k in range(K):
            rows = 2 * dt + p + k                                  # (16,)
            W1 = W1.at[rows, p, dt, :].add(jnp.broadcast_to(w1_kc[k], (16, C1)))
    W1 = W1.at[WIN, :, :, :].add(jnp.broadcast_to(conv1_b, (2, 16, C1)))   # bias row
    W1 = W1.at[WIN + 1, :, 0:2, :].set(NEG)      # tb == 0 : pooled times -2, -1
    W1 = W1.at[WIN + 2, :, 15, :].set(NEG)       # tb == 14: pooled time 125
    W1 = W1.at[WIN + 3, :, 7:16, :].set(NEG)     # tb == 15: pooled times >= 125
    W1m = W1.reshape(W1_ROWS, N1).astype(bf16)                     # (64, 512)

    # ---------------- conv2 per-window weight block (shared across tb) ----------------
    # Row (dt, c) = pooled window position; column (q, j', o): output time 8*tb+2*j'+q.
    w2_t = jnp.transpose(conv2_w, (2, 1, 0))                       # (K, C1, C2)
    W2 = jnp.zeros((16, C1, 2, 4, C2), f32)                        # (dt, c, q, j', o)
    for j in range(8):
        q, jp = j % 2, j // 2
        for k in range(K):
            W2 = W2.at[j + k, :, q, jp, :].add(w2_t[k])
    W2m = W2.reshape(16 * C1, N2).astype(bf16)                     # (256, 256)
    b2t = jnp.tile(conv2_b, 4)[None, :]                            # (1, 128)

    # ---------------- fc1 / fc2 (torch flatten order is c*62 + t') ----------------
    wf1_r = fc1_w.reshape(HID, C2, P2)                             # [h, o, t']
    big = jnp.zeros((HID, C2, 64), f32).at[:, :, :P2].set(wf1_r)   # pad t' 62 -> 64
    Wf1 = big.reshape(HID, C2, NTB, 4).transpose(2, 3, 1, 0).reshape(FLAT, HID)
    Wf1 = Wf1.astype(bf16)                                         # (2048, 64)
    bf1 = fc1_b[None, :]                                           # (1, 64)
    Wf2 = jnp.zeros((HID, OUT_PAD), f32).at[:, :OUT].set(jnp.transpose(fc2_w))
    Wf2 = Wf2.astype(bf16)                                         # (64, 128)
    bf2 = jnp.zeros((1, OUT_PAD), f32).at[0, :OUT].set(fc2_b)      # (1, 128)

    flops_per_sample = 2 * (NTB * W1_ROWS * N1 + NTB * 256 * N2 + FLAT * HID
                            + HID * OUT_PAD)
    bytes_accessed = (2 * (lhs1.size + W1m.size + W2m.size + Wf1.size + Wf2.size)
                      + 4 * (b2t.size + bf1.size + bf2.size + B_pad * OUT_PAD))
    cost = pl.CostEstimate(flops=int(B_pad * flops_per_sample), transcendentals=0,
                           bytes_accessed=int(bytes_accessed))

    out = pl.pallas_call(
        ppg_cnn_kernel,
        out_shape=jax.ShapeDtypeStruct((B_pad, OUT_PAD), jnp.float32),
        grid=(nb,),
        in_specs=[
            pl.BlockSpec((B_blk * NTB, W1_ROWS), lambda i: (i, 0)),  # streamed per block
            pl.BlockSpec((W1_ROWS, N1), lambda i: (0, 0)),           # weights stay resident
            pl.BlockSpec((16 * C1, N2), lambda i: (0, 0)),
            pl.BlockSpec((1, 128), lambda i: (0, 0)),
            pl.BlockSpec((FLAT, HID), lambda i: (0, 0)),
            pl.BlockSpec((1, HID), lambda i: (0, 0)),
            pl.BlockSpec((HID, OUT_PAD), lambda i: (0, 0)),
            pl.BlockSpec((1, OUT_PAD), lambda i: (0, 0)),
        ],
        out_specs=pl.BlockSpec((B_blk, OUT_PAD), lambda i: (i, 0)),
        compiler_params=pltpu.CompilerParams(
            dimension_semantics=("parallel",),
            vmem_limit_bytes=32 * 1024 * 1024,
        ),
        cost_estimate=cost,
    )(lhs1, W1m, W2m, b2t, Wf1, bf1, Wf2, bf2)

    return out[:B, :OUT]


def ppg_cnn_reference(x, params):
    """Pure-JAX reference mirroring the PyTorch module (NCL layout)."""
    conv1_w, conv1_b, conv2_w, conv2_b, fc1_w, fc1_b, fc2_w, fc2_b = params
    B = x.shape[0]
    dn = ('NCH', 'OIH', 'NCH')
    hi = lax.Precision.HIGHEST

    y1 = lax.conv_general_dilated(x, conv1_w, (1,), ((2, 2),),
                                  dimension_numbers=dn, precision=hi)
    y1 = jnp.maximum(y1 + conv1_b[None, :, None], 0.0)
    p1 = jnp.max(y1.reshape(B, C1, P1, 2), axis=-1)

    y2 = lax.conv_general_dilated(p1, conv2_w, (1,), ((2, 2),),
                                  dimension_numbers=dn, precision=hi)
    y2 = jnp.maximum(y2 + conv2_b[None, :, None], 0.0)
    p2 = jnp.max(y2[:, :, :2 * P2].reshape(B, C2, P2, 2), axis=-1)

    flat = p2.reshape(B, C2 * P2)
    h = jnp.maximum(jnp.dot(flat, fc1_w.T, precision=hi) + fc1_b[None, :], 0.0)
    return jnp.dot(h, fc2_w.T, precision=hi) + fc2_b[None, :]


def make_params(key):
    ks = jax.random.split(key, 8)
    conv1_w = 0.20 * jax.random.normal(ks[0], (C1, 1, K), jnp.float32)
    conv1_b = 0.10 * jax.random.normal(ks[1], (C1,), jnp.float32)
    conv2_w = 0.05 * jax.random.normal(ks[2], (C2, C1, K), jnp.float32)
    conv2_b = 0.10 * jax.random.normal(ks[3], (C2,), jnp.float32)
    fc1_w = 0.02 * jax.random.normal(ks[4], (HID, C2 * P2), jnp.float32)
    fc1_b = 0.10 * jax.random.normal(ks[5], (HID,), jnp.float32)
    fc2_w = 0.10 * jax.random.normal(ks[6], (OUT, HID), jnp.float32)
    fc2_b = 0.10 * jax.random.normal(ks[7], (OUT,), jnp.float32)
    return (conv1_w, conv1_b, conv2_w, conv2_b, fc1_w, fc1_b, fc2_w, fc2_b)


if __name__ == "__main__":
    B = 2
    key = jax.random.PRNGKey(0)
    kx, kp = jax.random.split(key)
    params = make_params(kp)
    x = jax.random.normal(kx, (B, 1, L_IN), jnp.float32)

    out = jax.block_until_ready(ppg_cnn_forward(x, params))
    assert out.shape == (B, OUT), out.shape

    ref = jax.block_until_ready(ppg_cnn_reference(x, params))
    assert jnp.allclose(out, ref, atol=2e-2, rtol=5e-2), (out, ref)

    print("KERNEL_OK")
</pallas_src>

<mosaic_0001>
module attributes {stable_mosaic.version = 11 : i64} {
  func.func @ppg_cnn_kernel(%arg0: i32, %arg1: memref<128x64xbf16, #tpu.memory_space<vmem>>, %arg2: memref<64x512xbf16, #tpu.memory_space<vmem>>, %arg3: memref<256x256xbf16, #tpu.memory_space<vmem>>, %arg4: memref<1x128xf32, #tpu.memory_space<vmem>>, %arg5: memref<2048x64xbf16, #tpu.memory_space<vmem>>, %arg6: memref<1x64xf32, #tpu.memory_space<vmem>>, %arg7: memref<64x128xbf16, #tpu.memory_space<vmem>>, %arg8: memref<1x128xf32, #tpu.memory_space<vmem>>, %arg9: memref<8x128xf32, #tpu.memory_space<vmem>>) attributes {dimension_semantics = [#tpu.dimension_semantics<parallel>], iteration_bounds = array<i64: 1>, scalar_prefetch = 0 : i64, scratch_operands = 0 : i64, tpu.core_type = #tpu.core_type<tc>, window_params = [{transform_indices = @transform_0, window_bounds = array<i64: 128, 64>}, {pipeline_mode = #tpu.pipeline_mode<synchronous>, transform_indices = @transform_1, window_bounds = array<i64: 64, 512>}, {pipeline_mode = #tpu.pipeline_mode<synchronous>, transform_indices = @transform_2, window_bounds = array<i64: 256, 256>}, {pipeline_mode = #tpu.pipeline_mode<synchronous>, transform_indices = @transform_3, window_bounds = array<i64: 1, 128>}, {pipeline_mode = #tpu.pipeline_mode<synchronous>, transform_indices = @transform_4, window_bounds = array<i64: 2048, 64>}, {pipeline_mode = #tpu.pipeline_mode<synchronous>, transform_indices = @transform_5, window_bounds = array<i64: 1, 64>}, {pipeline_mode = #tpu.pipeline_mode<synchronous>, transform_indices = @transform_6, window_bounds = array<i64: 64, 128>}, {pipeline_mode = #tpu.pipeline_mode<synchronous>, transform_indices = @transform_7, window_bounds = array<i64: 1, 128>}, {transform_indices = @transform_8, window_bounds = array<i64: 8, 128>}]} {
    %c0 = arith.constant 0 : index
    %c0_0 = arith.constant 0 : index
    %0 = vector.load %arg1[%c0, %c0_0] : memref<128x64xbf16, #tpu.memory_space<vmem>>, vector<128x64xbf16>
    %c0_1 = arith.constant 0 : index
    %c0_2 = arith.constant 0 : index
    %1 = vector.load %arg2[%c0_1, %c0_2] : memref<64x512xbf16, #tpu.memory_space<vmem>>, vector<64x512xbf16>
    %cst = arith.constant dense<0.000000e+00> : vector<128x512xf32>
    %2 = tpu.matmul %0, %1, %cst {dimension_numbers = #tpu.dot_dimension_numbers<[1], [0], [0], [1], [0, 0, 1, 1], [], []>} : vector<128x64xbf16>, vector<64x512xbf16>, vector<128x512xf32> -> vector<128x512xf32>
    %3 = vector.extract_strided_slice %2 {offsets = [0, 0], sizes = [128, 256], strides = [1, 1]} : vector<128x512xf32> to vector<128x256xf32>
    %4 = vector.extract_strided_slice %2 {offsets = [0, 256], sizes = [128, 256], strides = [1, 1]} : vector<128x512xf32> to vector<128x256xf32>
    %5 = arith.maximumf %3, %4 : vector<128x256xf32>
    %cst_3 = arith.constant 0.000000e+00 : f32
    %6 = vector.broadcast %cst_3 : f32 to vector<128x256xf32>
    %7 = arith.maximumf %5, %6 : vector<128x256xf32>
    %8 = arith.truncf %7 : vector<128x256xf32> to vector<128x256xbf16>
    %c0_4 = arith.constant 0 : index
    %c0_5 = arith.constant 0 : index
    %9 = vector.load %arg3[%c0_4, %c0_5] : memref<256x256xbf16, #tpu.memory_space<vmem>>, vector<256x256xbf16>
    %cst_6 = arith.constant dense<0.000000e+00> : vector<128x256xf32>
    %10 = tpu.matmul %8, %9, %cst_6 {dimension_numbers = #tpu.dot_dimension_numbers<[1], [0], [0], [1], [0, 0, 1, 1], [], []>} : vector<128x256xbf16>, vector<256x256xbf16>, vector<128x256xf32> -> vector<128x256xf32>
    %11 = vector.extract_strided_slice %10 {offsets = [0, 0], sizes = [128, 128], strides = [1, 1]} : vector<128x256xf32> to vector<128x128xf32>
    %12 = vector.extract_strided_slice %10 {offsets = [0, 128], sizes = [128, 128], strides = [1, 1]} : vector<128x256xf32> to vector<128x128xf32>
    %13 = arith.maximumf %11, %12 : vector<128x128xf32>
    %c0_7 = arith.constant 0 : index
    %c0_8 = arith.constant 0 : index
    %14 = vector.load %arg4[%c0_7, %c0_8] : memref<1x128xf32, #tpu.memory_space<vmem>>, vector<1x128xf32>
    %15 = vector.broadcast %14 : vector<1x128xf32> to vector<128x128xf32>
    %16 = arith.addf %13, %15 : vector<128x128xf32>
    %cst_9 = arith.constant 0.000000e+00 : f32
    %17 = vector.broadcast %cst_9 : f32 to vector<128x128xf32>
    %18 = arith.maximumf %16, %17 : vector<128x128xf32>
    %19 = vector.shape_cast %18 : vector<128x128xf32> to vector<8x2048xf32>
    %20 = arith.truncf %19 : vector<8x2048xf32> to vector<8x2048xbf16>
    %c0_10 = arith.constant 0 : index
    %c0_11 = arith.constant 0 : index
    %21 = vector.load %arg5[%c0_10, %c0_11] : memref<2048x64xbf16, #tpu.memory_space<vmem>>, vector<2048x64xbf16>
    %cst_12 = arith.constant dense<0.000000e+00> : vector<8x64xf32>
    %22 = tpu.matmul %20, %21, %cst_12 {dimension_numbers = #tpu.dot_dimension_numbers<[1], [0], [0], [1], [0, 0, 1, 1], [], []>} : vector<8x2048xbf16>, vector<2048x64xbf16>, vector<8x64xf32> -> vector<8x64xf32>
    %c0_13 = arith.constant 0 : index
    %c0_14 = arith.constant 0 : index
    %23 = vector.load %arg6[%c0_13, %c0_14] : memref<1x64xf32, #tpu.memory_space<vmem>>, vector<1x64xf32>
    %24 = vector.broadcast %23 : vector<1x64xf32> to vector<8x64xf32>
    %25 = arith.addf %22, %24 : vector<8x64xf32>
    %cst_15 = arith.constant 0.000000e+00 : f32
    %26 = vector.broadcast %cst_15 : f32 to vector<8x64xf32>
    %27 = arith.maximumf %25, %26 : vector<8x64xf32>
    %28 = arith.truncf %27 : vector<8x64xf32> to vector<8x64xbf16>
    %c0_16 = arith.constant 0 : index
    %c0_17 = arith.constant 0 : index
    %29 = vector.load %arg7[%c0_16, %c0_17] : memref<64x128xbf16, #tpu.memory_space<vmem>>, vector<64x128xbf16>
    %cst_18 = arith.constant dense<0.000000e+00> : vector<8x128xf32>
    %30 = tpu.matmul %28, %29, %cst_18 {dimension_numbers = #tpu.dot_dimension_numbers<[1], [0], [0], [1], [0, 0, 1, 1], [], []>} : vector<8x64xbf16>, vector<64x128xbf16>, vector<8x128xf32> -> vector<8x128xf32>
    %c0_19 = arith.constant 0 : index
    %c0_20 = arith.constant 0 : index
    %31 = vector.load %arg8[%c0_19, %c0_20] : memref<1x128xf32, #tpu.memory_space<vmem>>, vector<1x128xf32>
    %32 = vector.broadcast %31 : vector<1x128xf32> to vector<8x128xf32>
    %33 = arith.addf %30, %32 : vector<8x128xf32>
    %c0_21 = arith.constant 0 : index
    %c0_22 = arith.constant 0 : index
    %34 = vector.load %arg9[%c0_21, %c0_22] : memref<8x128xf32, #tpu.memory_space<vmem>>, vector<8x128xf32>
    tpu.vector_store %arg9[%c0_21, %c0_22], %33 {strides = array<i32>} : memref<8x128xf32, #tpu.memory_space<vmem>>, vector<8x128xf32>,
    return
  }
  func.func @transform_0(%arg0: i32) -> (i32, i32) {
    %c0_i32 = arith.constant 0 : i32
    %c0_i32_0 = arith.constant 0 : i32
    return %arg0, %c0_i32 : i32, i32
  }
  func.func @transform_1(%arg0: i32) -> (i32, i32) {
    %c0_i32 = arith.constant 0 : i32
    %c0_i32_0 = arith.constant 0 : i32
    %c0_i32_1 = arith.constant 0 : i32
    return %c0_i32, %c0_i32_0 : i32, i32
  }
  func.func @transform_2(%arg0: i32) -> (i32, i32) {
    %c0_i32 = arith.constant 0 : i32
    %c0_i32_0 = arith.constant 0 : i32
    %c0_i32_1 = arith.constant 0 : i32
    return %c0_i32, %c0_i32_0 : i32, i32
  }
  func.func @transform_3(%arg0: i32) -> (i32, i32) {
    %c0_i32 = arith.constant 0 : i32
    %c0_i32_0 = arith.constant 0 : i32
    %c0_i32_1 = arith.constant 0 : i32
    return %c0_i32, %c0_i32_0 : i32, i32
  }
  func.func @transform_4(%arg0: i32) -> (i32, i32) {
    %c0_i32 = arith.constant 0 : i32
    %c0_i32_0 = arith.constant 0 : i32
    %c0_i32_1 = arith.constant 0 : i32
    return %c0_i32, %c0_i32_0 : i32, i32
  }
  func.func @transform_5(%arg0: i32) -> (i32, i32) {
    %c0_i32 = arith.constant 0 : i32
    %c0_i32_0 = arith.constant 0 : i32
    %c0_i32_1 = arith.constant 0 : i32
    return %c0_i32, %c0_i32_0 : i32, i32
  }
  func.func @transform_6(%arg0: i32) -> (i32, i32) {
    %c0_i32 = arith.constant 0 : i32
    %c0_i32_0 = arith.constant 0 : i32
    %c0_i32_1 = arith.constant 0 : i32
    return %c0_i32, %c0_i32_0 : i32, i32
  }
  func.func @transform_7(%arg0: i32) -> (i32, i32) {
    %c0_i32 = arith.constant 0 : i32
    %c0_i32_0 = arith.constant 0 : i32
    %c0_i32_1 = arith.constant 0 : i32
    return %c0_i32, %c0_i32_0 : i32, i32
  }
  func.func @transform_8(%arg0: i32) -> (i32, i32) {
    %c0_i32 = arith.constant 0 : i32
    %c0_i32_0 = arith.constant 0 : i32
    return %arg0, %c0_i32 : i32, i32
  }
}

</mosaic_0001>

<llo_original>
// kernel: tpu_custom_call.1
$region0: #{tpu_custom_call.1}
  #allocation0 [shape = 'u32[]', space=smem, size = 0x4, offset = 0x4, fixed_abs, tag = 'smem constant byte address 0x4 - core index']
  #allocation1 [shape = 'u32[72,128]{1,0:T(1,128)}', space=vmem, size = 0x9000, scoped, tag = 'internal scratch']
  %s0 = inlined_call_operand.vmem [shape: bf16[128,64], index: 0, kind: input, shape index: {}]
  %s1 = inlined_call_operand.vmem [shape: bf16[64,512], index: 1, kind: input, shape index: {}]
  %s2 = inlined_call_operand.vmem [shape: bf16[256,256], index: 2, kind: input, shape index: {}]
  %s3 = inlined_call_operand.vmem [shape: f32[1,128], index: 3, kind: input, shape index: {}]
  %s4 = inlined_call_operand.vmem [shape: bf16[2048,64], index: 4, kind: input, shape index: {}]
  %s5 = inlined_call_operand.vmem [shape: f32[1,64], index: 5, kind: input, shape index: {}]
  %s6 = inlined_call_operand.vmem [shape: bf16[64,128], index: 6, kind: input, shape index: {}]
  %s7 = inlined_call_operand.vmem [shape: f32[1,128], index: 7, kind: input, shape index: {}]
  %s8 = inlined_call_operand.hbm [shape: f32[8,128], index: 8, kind: output, shape index: {}]
  %s9 = sld [smem:[#allocation0]]
  $region42: #{tpu_custom_call.1} parent=0
    _
  %s11 = ssub.s32 1, %s9
  %s12 = scalar_select 0, %s11, %s9
  $region1: #{tpu_custom_call.1} parent=0
    #allocation2 [shape = 'u8[4096]{0}', space=vmem, size = 0x1000, scoped, tag = 'output window, operand 0, single buffered']
    #allocation3 [shape = 's32[1]{0}', space=sflag, size = 0x4, scoped, tag = 'scoped memory for tpu_custom_call.1']
    %13 = vsyncpa [#allocation3], 0
    // Predicated region
    $region2: #{tpu_custom_call.1} parent=1 // pred_check
      _
    $region3: #{tpu_custom_call.1} parent=1 // pred_check_branch
      %15 = sbr.rel (0) target = $region5
    $region4: #{tpu_custom_call.1} parent=1 // pred_region
      _
    $region5: #{tpu_custom_call.1} parent=1 // pred_fallthru
      _
    // Predicated region
    $region6: #{tpu_custom_call.1} parent=1 // pred_check
      _
    $region7: #{tpu_custom_call.1} parent=1 // pred_check_branch
      %17 = sbr.rel (0) target = $region9
    $region8: #{tpu_custom_call.1} parent=1 // pred_region
      _
    $region9: #{tpu_custom_call.1} parent=1 // pred_fallthru
      _
    // Predicated region
    $region10: #{tpu_custom_call.1} parent=1 // pred_check
      _
    $region11: #{tpu_custom_call.1} parent=1 // pred_check_branch
      %19 = sbr.rel (0) target = $region13
    $region12: #{tpu_custom_call.1} parent=1 // pred_region
      _
    $region13: #{tpu_custom_call.1} parent=1 // pred_fallthru
      _
    // Predicated region
    $region14: #{tpu_custom_call.1} parent=1 // pred_check
      _
    $region15: #{tpu_custom_call.1} parent=1 // pred_check_branch
      %21 = sbr.rel (0) target = $region17
    $region16: #{tpu_custom_call.1} parent=1 // pred_region
      _
    $region17: #{tpu_custom_call.1} parent=1 // pred_fallthru
      _
    // Predicated region
    $region18: #{tpu_custom_call.1} parent=1 // pred_check
      _
    $region19: #{tpu_custom_call.1} parent=1 // pred_check_branch
      %23 = sbr.rel (0) target = $region21
    $region20: #{tpu_custom_call.1} parent=1 // pred_region
      _
    $region21: #{tpu_custom_call.1} parent=1 // pred_fallthru
      _
    // Predicated region
    $region22: #{tpu_custom_call.1} parent=1 // pred_check
      _
    $region23: #{tpu_custom_call.1} parent=1 // pred_check_branch
      %25 = sbr.rel (0) target = $region25
    $region24: #{tpu_custom_call.1} parent=1 // pred_region
      _
    $region25: #{tpu_custom_call.1} parent=1 // pred_fallthru
      _
    // Predicated region
    $region26: #{tpu_custom_call.1} parent=1 // pred_check
      _
    $region27: #{tpu_custom_call.1} parent=1 // pred_check_branch
      %27 = sbr.rel (0) target = $region29
    $region28: #{tpu_custom_call.1} parent=1 // pred_region
      _
    $region29: #{tpu_custom_call.1} parent=1 // pred_fallthru
      _
    // Predicated region
    $region30: #{tpu_custom_call.1} parent=1 // pred_check
      _
    $region31: #{tpu_custom_call.1} parent=1 // pred_check_branch
      %29 = sbr.rel (0) target = $region33
    $region32: #{tpu_custom_call.1} parent=1 // pred_region
      _
    $region33: #{tpu_custom_call.1} parent=1 // pred_fallthru
      _
    %v31 = vld [vmem:[%s0] sm:$0xf]
    %v32 = vld [vmem:[%s0 + $0x4] sm:$0xf]
    %v33 = vld [vmem:[%s0 + $0x8] sm:$0xf]
    %v34 = vld [vmem:[%s0 + $0xc] sm:$0xf]
    %v35 = vld [vmem:[%s0 + $0x10] sm:$0xf]
    %v36 = vld [vmem:[%s0 + $0x14] sm:$0xf]
    %v37 = vld [vmem:[%s0 + $0x18] sm:$0xf]
    %v38 = vld [vmem:[%s0 + $0x1c] sm:$0xf]
    %v39 = vld [vmem:[%s0 + $0x20] sm:$0xf]
    %v40 = vld [vmem:[%s0 + $0x24] sm:$0xf]
    %v41 = vld [vmem:[%s0 + $0x28] sm:$0xf]
    %v42 = vld [vmem:[%s0 + $0x2c] sm:$0xf]
    %v43 = vld [vmem:[%s0 + $0x30] sm:$0xf]
    %v44 = vld [vmem:[%s0 + $0x34] sm:$0xf]
    %v45 = vld [vmem:[%s0 + $0x38] sm:$0xf]
    %v46 = vld [vmem:[%s0 + $0x3c] sm:$0xf]
    %v47 = vld [vmem:[%s1] sm:$0xff]
    %v48 = vld [vmem:[%s1 + $0x8] sm:$0xff]
    %v49 = vld [vmem:[%s1 + $0x10] sm:$0xff]
    %v50 = vld [vmem:[%s1 + $0x18] sm:$0xff]
    %v51 = vld [vmem:[%s1 + $0x20] sm:$0xff]
    %v52 = vld [vmem:[%s1 + $0x28] sm:$0xff]
    %v53 = vld [vmem:[%s1 + $0x30] sm:$0xff]
    %v54 = vld [vmem:[%s1 + $0x38] sm:$0xff]
    %v55 = vld [vmem:[%s1 + $0x40] sm:$0xff]
    %v56 = vld [vmem:[%s1 + $0x48] sm:$0xff]
    %v57 = vld [vmem:[%s1 + $0x50] sm:$0xff]
    %v58 = vld [vmem:[%s1 + $0x58] sm:$0xff]
    %v59 = vld [vmem:[%s1 + $0x60] sm:$0xff]
    %v60 = vld [vmem:[%s1 + $0x68] sm:$0xff]
    %v61 = vld [vmem:[%s1 + $0x70] sm:$0xff]
    %v62 = vld [vmem:[%s1 + $0x78] sm:$0xff]
    %v79 = vunpack.c.l.b16 %v31
    %v80 = vunpack.c.l.b16 %v32
    %v81 = vunpack.c.l.b16 %v33
    %v82 = vunpack.c.l.b16 %v34
    %v83 = vunpack.c.l.b16 %v35
    %v84 = vunpack.c.l.b16 %v36
    %v85 = vunpack.c.l.b16 %v37
    %v86 = vunpack.c.l.b16 %v38
    %v87 = vunpack.c.l.b16 %v39
    %v88 = vunpack.c.l.b16 %v40
    %v89 = vunpack.c.l.b16 %v41
    %v90 = vunpack.c.l.b16 %v42
    %v91 = vunpack.c.l.b16 %v43
    %v92 = vunpack.c.l.b16 %v44
    %v93 = vunpack.c.l.b16 %v45
    %v94 = vunpack.c.l.b16 %v46
    %v95 = vpack.c.b16 %v80, %v79
    %v96 = vpack.c.b16 %v82, %v81
    %v97 = vpack.c.b16 %v84, %v83
    %v98 = vpack.c.b16 %v86, %v85
    %v99 = vpack.c.b16 %v88, %v87
    %v100 = vpack.c.b16 %v90, %v89
    %v101 = vpack.c.b16 %v92, %v91
    %v102 = vpack.c.b16 %v94, %v93
    %v119 = vunpack.c.l.b16 %v47
    %v120 = vunpack.c.h.b16 %v47
    %v121 = vunpack.c.l.b16 %v48
    %v122 = vunpack.c.h.b16 %v48
    %v123 = vunpack.c.l.b16 %v49
    %v124 = vunpack.c.h.b16 %v49
    %v125 = vunpack.c.l.b16 %v50
    %v126 = vunpack.c.h.b16 %v50
    %v127 = vunpack.c.l.b16 %v51
    %v128 = vunpack.c.h.b16 %v51
    %v129 = vunpack.c.l.b16 %v52
    %v130 = vunpack.c.h.b16 %v52
    %v131 = vunpack.c.l.b16 %v53
    %v132 = vunpack.c.h.b16 %v53
    %v133 = vunpack.c.l.b16 %v54
    %v134 = vunpack.c.h.b16 %v54
    %v135 = vunpack.c.l.b16 %v55
    %v136 = vunpack.c.h.b16 %v55
    %v137 = vunpack.c.l.b16 %v56
    %v138 = vunpack.c.h.b16 %v56
    %v139 = vunpack.c.l.b16 %v57
    %v140 = vunpack.c.h.b16 %v57
    %v141 = vunpack.c.l.b16 %v58
    %v142 = vunpack.c.h.b16 %v58
    %v143 = vunpack.c.l.b16 %v59
    %v144 = vunpack.c.h.b16 %v59
    %v145 = vunpack.c.l.b16 %v60
    %v146 = vunpack.c.h.b16 %v60
    %v147 = vunpack.c.l.b16 %v61
    %v148 = vunpack.c.h.b16 %v61
    %v149 = vunpack.c.l.b16 %v62
    %v150 = vunpack.c.h.b16 %v62
    %v151 = vpack.c.b16 %v123, %v119
    %v152 = vpack.c.b16 %v124, %v120
    %v153 = vpack.c.b16 %v125, %v121
    %v154 = vpack.c.b16 %v126, %v122
    %v155 = vpack.c.b16 %v131, %v127
    %v156 = vpack.c.b16 %v132, %v128
    %v157 = vpack.c.b16 %v133, %v129
    %v158 = vpack.c.b16 %v134, %v130
    %v159 = vpack.c.b16 %v139, %v135
    %v160 = vpack.c.b16 %v140, %v136
    %v161 = vpack.c.b16 %v141, %v137
    %v162 = vpack.c.b16 %v142, %v138
    %v163 = vpack.c.b16 %v147, %v143
    %v164 = vpack.c.b16 %v148, %v144
    %v165 = vpack.c.b16 %v149, %v145
    %v166 = vpack.c.b16 %v150, %v146
    %vm183 = vcmask 523264
    %v185 = vsel %vm183, %v95, 0
    %v188 = vsel %vm183, %v96, 0
    %v191 = vsel %vm183, %v97, 0
    %v194 = vsel %vm183, %v98, 0
    %v197 = vsel %vm183, %v99, 0
    %v200 = vsel %vm183, %v100, 0
    %v203 = vsel %vm183, %v101, 0
    %v206 = vsel %vm183, %v102, 0
    %208 = vmatpush.bf16.msra.mxu0 0
    %209 = vmatpush.bf16.msra.mxu0 0
    %210 = vmatpush.bf16.msra.mxu0 0
    %211 = vmatpush.bf16.msra.mxu0 0
    %212 = vmatpush.bf16.msra.mxu0 %v163
    %213 = vmatpush.bf16.msra.mxu0 %v159
    %214 = vmatpush.bf16.msra.mxu0 %v155
    %215 = vmatpush.bf16.msra.mxu0 %v151
    %216 = vmatmul.bf16.gmra.mxu0 %v185
    %v217 = vpop.f32.mrf.mxu0
    %v218 = vadd.f32 0.0, %v217
    %v219 = vpop.f32.mrf.mxu0
    %v220 = vadd.f32 0.0, %v219
    %221 = vmatmul.bf16.gmra.mxu0 %v188
    %v222 = vpop.f32.mrf.mxu0
    %v223 = vadd.f32 0.0, %v222
    %v224 = vpop.f32.mrf.mxu0
    %v225 = vadd.f32 0.0, %v224
    %226 = vmatmul.bf16.gmra.mxu0 %v191
    %v227 = vpop.f32.mrf.mxu0
    %v228 = vadd.f32 0.0, %v227
    %v229 = vpop.f32.mrf.mxu0
    %v230 = vadd.f32 0.0, %v229
    %231 = vmatmul.bf16.gmra.mxu0 %v194
    %v232 = vpop.f32.mrf.mxu0
    %v233 = vadd.f32 0.0, %v232
    %v234 = vpop.f32.mrf.mxu0
    %v235 = vadd.f32 0.0, %v234
    %236 = vmatmul.bf16.gmra.mxu0 %v197
    %v237 = vpop.f32.mrf.mxu0
    %v238 = vadd.f32 0.0, %v237
    %v239 = vpop.f32.mrf.mxu0
    %v240 = vadd.f32 0.0, %v239
    %241 = vmatmul.bf16.gmra.mxu0 %v200
    %v242 = vpop.f32.mrf.mxu0
    %v243 = vadd.f32 0.0, %v242
    %v244 = vpop.f32.mrf.mxu0
    %v245 = vadd.f32 0.0, %v244
    %246 = vmatmul.bf16.gmra.mxu0 %v203
    %v247 = vpop.f32.mrf.mxu0
    %v248 = vadd.f32 0.0, %v247
    %v249 = vpop.f32.mrf.mxu0
    %v250 = vadd.f32 0.0, %v249
    %251 = vmatmul.bf16.gmra.mxu0 %v206
    %v252 = vpop.f32.mrf.mxu0
    %v253 = vadd.f32 0.0, %v252
    %v254 = vpop.f32.mrf.mxu0
    %v255 = vadd.f32 0.0, %v254
    %256 = vdwg.mxu0
    %257 = vmatpush.bf16.msra.mxu0 0
    %258 = vmatpush.bf16.msra.mxu0 0
    %259 = vmatpush.bf16.msra.mxu0 0
    %260 = vmatpush.bf16.msra.mxu0 0
    %261 = vmatpush.bf16.msra.mxu0 %v164
    %262 = vmatpush.bf16.msra.mxu0 %v160
    %263 = vmatpush.bf16.msra.mxu0 %v156
    %264 = vmatpush.bf16.msra.mxu0 %v152
    %265 = vmatmul.bf16.gmra.mxu0 %v185
    %v266 = vpop.f32.mrf.mxu0
    %v267 = vadd.f32 0.0, %v266
    %v268 = vpop.f32.mrf.mxu0
    %v269 = vadd.f32 0.0, %v268
    %270 = vmatmul.bf16.gmra.mxu0 %v188
    %v271 = vpop.f32.mrf.mxu0
    %v272 = vadd.f32 0.0, %v271
    %v273 = vpop.f32.mrf.mxu0
    %v274 = vadd.f32 0.0, %v273
    %275 = vmatmul.bf16.gmra.mxu0 %v191
    %v276 = vpop.f32.mrf.mxu0
    %v277 = vadd.f32 0.0, %v276
    %v278 = vpop.f32.mrf.mxu0
    %v279 = vadd.f32 0.0, %v278
    %280 = vmatmul.bf16.gmra.mxu0 %v194
    %v281 = vpop.f32.mrf.mxu0
    %v282 = vadd.f32 0.0, %v281
    %v283 = vpop.f32.mrf.mxu0
    %v284 = vadd.f32 0.0, %v283
    %285 = vmatmul.bf16.gmra.mxu0 %v197
    %v286 = vpop.f32.mrf.mxu0
    %v287 = vadd.f32 0.0, %v286
    %v288 = vpop.f32.mrf.mxu0
    %v289 = vadd.f32 0.0, %v288
    %290 = vmatmul.bf16.gmra.mxu0 %v200
    %v291 = vpop.f32.mrf.mxu0
    %v292 = vadd.f32 0.0, %v291
    %v293 = vpop.f32.mrf.mxu0
    %v294 = vadd.f32 0.0, %v293
    %295 = vmatmul.bf16.gmra.mxu0 %v203
    %v296 = vpop.f32.mrf.mxu0
    %v297 = vadd.f32 0.0, %v296
    %v298 = vpop.f32.mrf.mxu0
    %v299 = vadd.f32 0.0, %v298
    %300 = vmatmul.bf16.gmra.mxu0 %v206
    %v301 = vpop.f32.mrf.mxu0
    %v302 = vadd.f32 0.0, %v301
    %v303 = vpop.f32.mrf.mxu0
    %v304 = vadd.f32 0.0, %v303
    %305 = vdwg.mxu0
    %306 = vmatpush.bf16.msra.mxu0 0
    %307 = vmatpush.bf16.msra.mxu0 0
    %308 = vmatpush.bf16.msra.mxu0 0
    %309 = vmatpush.bf16.msra.mxu0 0
    %310 = vmatpush.bf16.msra.mxu0 %v165
    %311 = vmatpush.bf16.msra.mxu0 %v161
    %312 = vmatpush.bf16.msra.mxu0 %v157
    %313 = vmatpush.bf16.msra.mxu0 %v153
    %314 = vmatmul.bf16.gmra.mxu0 %v185
    %v315 = vpop.f32.mrf.mxu0
    %v316 = vadd.f32 0.0, %v315
    %v317 = vpop.f32.mrf.mxu0
    %v318 = vadd.f32 0.0, %v317
    %319 = vmatmul.bf16.gmra.mxu0 %v188
    %v320 = vpop.f32.mrf.mxu0
    %v321 = vadd.f32 0.0, %v320
    %v322 = vpop.f32.mrf.mxu0
    %v323 = vadd.f32 0.0, %v322
    %324 = vmatmul.bf16.gmra.mxu0 %v191
    %v325 = vpop.f32.mrf.mxu0
    %v326 = vadd.f32 0.0, %v325
    %v327 = vpop.f32.mrf.mxu0
    %v328 = vadd.f32 0.0, %v327
    %329 = vmatmul.bf16.gmra.mxu0 %v194
    %v330 = vpop.f32.mrf.mxu0
    %v331 = vadd.f32 0.0, %v330
    %v332 = vpop.f32.mrf.mxu0
    %v333 = vadd.f32 0.0, %v332
    %334 = vmatmul.bf16.gmra.mxu0 %v197
    %v335 = vpop.f32.mrf.mxu0
    %v336 = vadd.f32 0.0, %v335
    %v337 = vpop.f32.mrf.mxu0
    %v338 = vadd.f32 0.0, %v337
    %339 = vmatmul.bf16.gmra.mxu0 %v200
    %v340 = vpop.f32.mrf.mxu0
    %v341 = vadd.f32 0.0, %v340
    %v342 = vpop.f32.mrf.mxu0
    %v343 = vadd.f32 0.0, %v342
    %344 = vmatmul.bf16.gmra.mxu0 %v203
    %v345 = vpop.f32.mrf.mxu0
    %v346 = vadd.f32 0.0, %v345
    %v347 = vpop.f32.mrf.mxu0
    %v348 = vadd.f32 0.0, %v347
    %349 = vmatmul.bf16.gmra.mxu0 %v206
    %v350 = vpop.f32.mrf.mxu0
    %v351 = vadd.f32 0.0, %v350
    %v352 = vpop.f32.mrf.mxu0
    %v353 = vadd.f32 0.0, %v352
    %354 = vdwg.mxu0
    %355 = vmatpush.bf16.msra.mxu0 0
    %356 = vmatpush.bf16.msra.mxu0 0
    %357 = vmatpush.bf16.msra.mxu0 0
    %358 = vmatpush.bf16.msra.mxu0 0
    %359 = vmatpush.bf16.msra.mxu0 %v166
    %360 = vmatpush.bf16.msra.mxu0 %v162
    %361 = vmatpush.bf16.msra.mxu0 %v158
    %362 = vmatpush.bf16.msra.mxu0 %v154
    %363 = vmatmul.bf16.gmra.mxu0 %v185
    %v364 = vpop.f32.mrf.mxu0
    %v365 = vadd.f32 0.0, %v364
    %v366 = vpop.f32.mrf.mxu0
    %v367 = vadd.f32 0.0, %v366
    %368 = vmatmul.bf16.gmra.mxu0 %v188
    %v369 = vpop.f32.mrf.mxu0
    %v370 = vadd.f32 0.0, %v369
    %v371 = vpop.f32.mrf.mxu0
    %v372 = vadd.f32 0.0, %v371
    %373 = vmatmul.bf16.gmra.mxu0 %v191
    %v374 = vpop.f32.mrf.mxu0
    %v375 = vadd.f32 0.0, %v374
    %v376 = vpop.f32.mrf.mxu0
    %v377 = vadd.f32 0.0, %v376
    %378 = vmatmul.bf16.gmra.mxu0 %v194
    %v379 = vpop.f32.mrf.mxu0
    %v380 = vadd.f32 0.0, %v379
    %v381 = vpop.f32.mrf.mxu0
    %v382 = vadd.f32 0.0, %v381
    %383 = vmatmul.bf16.gmra.mxu0 %v197
    %v384 = vpop.f32.mrf.mxu0
    %v385 = vadd.f32 0.0, %v384
    %v386 = vpop.f32.mrf.mxu0
    %v387 = vadd.f32 0.0, %v386
    %388 = vmatmul.bf16.gmra.mxu0 %v200
    %v389 = vpop.f32.mrf.mxu0
    %v390 = vadd.f32 0.0, %v389
    %v391 = vpop.f32.mrf.mxu0
    %v392 = vadd.f32 0.0, %v391
    %393 = vmatmul.bf16.gmra.mxu0 %v203
    %v394 = vpop.f32.mrf.mxu0
    %v395 = vadd.f32 0.0, %v394
    %v396 = vpop.f32.mrf.mxu0
    %v397 = vadd.f32 0.0, %v396
    %398 = vmatmul.bf16.gmra.mxu0 %v206
    %v399 = vpop.f32.mrf.mxu0
    %v400 = vadd.f32 0.0, %v399
    %v401 = vpop.f32.mrf.mxu0
    %v402 = vadd.f32 0.0, %v401
    %403 = vdwg.mxu0
    %v404 = vmax.f32 %v218, %v316
    %v405 = vmax.f32 %v267, %v365
    %v406 = vmax.f32 %v220, %v318
    %v407 = vmax.f32 %v269, %v367
    %v408 = vmax.f32 %v223, %v321
    %v409 = vmax.f32 %v272, %v370
    %v410 = vmax.f32 %v225, %v323
    %v411 = vmax.f32 %v274, %v372
    %v412 = vmax.f32 %v228, %v326
    %v413 = vmax.f32 %v277, %v375
    %v414 = vmax.f32 %v230, %v328
    %v415 = vmax.f32 %v279, %v377
    %v416 = vmax.f32 %v233, %v331
    %v417 = vmax.f32 %v282, %v380
    %v418 = vmax.f32 %v235, %v333
    %v419 = vmax.f32 %v284, %v382
    %v420 = vmax.f32 %v238, %v336
    %v421 = vmax.f32 %v287, %v385
    %v422 = vmax.f32 %v240, %v338
    %v423 = vmax.f32 %v289, %v387
    %v424 = vmax.f32 %v243, %v341
    %v425 = vmax.f32 %v292, %v390
    %v426 = vmax.f32 %v245, %v343
    %v427 = vmax.f32 %v294, %v392
    %v428 = vmax.f32 %v248, %v346
    %v429 = vmax.f32 %v297, %v395
    %v430 = vmax.f32 %v250, %v348
    %v431 = vmax.f32 %v299, %v397
    %v432 = vmax.f32 %v253, %v351
    %v433 = vmax.f32 %v302, %v400
    %v434 = vmax.f32 %v255, %v353
    %v435 = vmax.f32 %v304, %v402
    %v436 = vmax.f32 %v404, 0.0
    %v437 = vmax.f32 %v405, 0.0
    %v438 = vmax.f32 %v406, 0.0
    %v439 = vmax.f32 %v407, 0.0
    %v440 = vmax.f32 %v408, 0.0
    %v441 = vmax.f32 %v409, 0.0
    %v442 = vmax.f32 %v410, 0.0
    %v443 = vmax.f32 %v411, 0.0
    %v444 = vmax.f32 %v412, 0.0
    %v445 = vmax.f32 %v413, 0.0
    %v446 = vmax.f32 %v414, 0.0
    %v447 = vmax.f32 %v415, 0.0
    %v448 = vmax.f32 %v416, 0.0
    %v449 = vmax.f32 %v417, 0.0
    %v450 = vmax.f32 %v418, 0.0
    %v451 = vmax.f32 %v419, 0.0
    %v452 = vmax.f32 %v420, 0.0
    %v453 = vmax.f32 %v421, 0.0
    %v454 = vmax.f32 %v422, 0.0
    %v455 = vmax.f32 %v423, 0.0
    %v456 = vmax.f32 %v424, 0.0
    %v457 = vmax.f32 %v425, 0.0
    %v458 = vmax.f32 %v426, 0.0
    %v459 = vmax.f32 %v427, 0.0
    %v460 = vmax.f32 %v428, 0.0
    %v461 = vmax.f32 %v429, 0.0
    %v462 = vmax.f32 %v430, 0.0
    %v463 = vmax.f32 %v431, 0.0
    %v464 = vmax.f32 %v432, 0.0
    %v465 = vmax.f32 %v433, 0.0
    %v466 = vmax.f32 %v434, 0.0
    %v467 = vmax.f32 %v435, 0.0
    %v468 = vpack.c.bf16 %v438, %v436
    %v469 = vpack.c.bf16 %v439, %v437
    %v470 = vpack.c.bf16 %v442, %v440
    %v471 = vpack.c.bf16 %v443, %v441
    %v472 = vpack.c.bf16 %v446, %v444
    %v473 = vpack.c.bf16 %v447, %v445
    %v474 = vpack.c.bf16 %v450, %v448
    %v475 = vpack.c.bf16 %v451, %v449
    %v476 = vpack.c.bf16 %v454, %v452
    %v477 = vpack.c.bf16 %v455, %v453
    %v478 = vpack.c.bf16 %v458, %v456
    %v479 = vpack.c.bf16 %v459, %v457
    %v480 = vpack.c.bf16 %v462, %v460
    %v481 = vpack.c.bf16 %v463, %v461
    %v482 = vpack.c.bf16 %v466, %v464
    %v483 = vpack.c.bf16 %v467, %v465
    %v484 = vld [vmem:[%s2] sm:$0xff]
    %v485 = vld [vmem:[%s2 + $0x8] sm:$0xff]
    %v486 = vld [vmem:[%s2 + $0x10] sm:$0xff]
    %v487 = vld [vmem:[%s2 + $0x18] sm:$0xff]
    %v488 = vld [vmem:[%s2 + $0x20] sm:$0xff]
    %v489 = vld [vmem:[%s2 + $0x28] sm:$0xff]
    %v490 = vld [vmem:[%s2 + $0x30] sm:$0xff]
    %v491 = vld [vmem:[%s2 + $0x38] sm:$0xff]
    %v492 = vld [vmem:[%s2 + $0x40] sm:$0xff]
    %v493 = vld [vmem:[%s2 + $0x48] sm:$0xff]
    %v494 = vld [vmem:[%s2 + $0x50] sm:$0xff]
    %v495 = vld [vmem:[%s2 + $0x58] sm:$0xff]
    %v496 = vld [vmem:[%s2 + $0x60] sm:$0xff]
    %v497 = vld [vmem:[%s2 + $0x68] sm:$0xff]
    %v498 = vld [vmem:[%s2 + $0x70] sm:$0xff]
    %v499 = vld [vmem:[%s2 + $0x78] sm:$0xff]
    %v500 = vld [vmem:[%s2 + $0x80] sm:$0xff]
    %v501 = vld [vmem:[%s2 + $0x88] sm:$0xff]
    %v502 = vld [vmem:[%s2 + $0x90] sm:$0xff]
    %v503 = vld [vmem:[%s2 + $0x98] sm:$0xff]
    %v504 = vld [vmem:[%s2 + $0xa0] sm:$0xff]
    %v505 = vld [vmem:[%s2 + $0xa8] sm:$0xff]
    %v506 = vld [vmem:[%s2 + $0xb0] sm:$0xff]
    %v507 = vld [vmem:[%s2 + $0xb8] sm:$0xff]
    %v508 = vld [vmem:[%s2 + $0xc0] sm:$0xff]
    %v509 = vld [vmem:[%s2 + $0xc8] sm:$0xff]
    %v510 = vld [vmem:[%s2 + $0xd0] sm:$0xff]
    %v511 = vld [vmem:[%s2 + $0xd8] sm:$0xff]
    %v512 = vld [vmem:[%s2 + $0xe0] sm:$0xff]
    %v513 = vld [vmem:[%s2 + $0xe8] sm:$0xff]
    %v514 = vld [vmem:[%s2 + $0xf0] sm:$0xff]
    %v515 = vld [vmem:[%s2 + $0xf8] sm:$0xff]
    %v548 = vunpack.c.l.b16 %v484
    %v549 = vunpack.c.h.b16 %v484
    %v550 = vunpack.c.l.b16 %v485
    %v551 = vunpack.c.h.b16 %v485
    %v552 = vunpack.c.l.b16 %v486
    %v553 = vunpack.c.h.b16 %v486
    %v554 = vunpack.c.l.b16 %v487
    %v555 = vunpack.c.h.b16 %v487
    %v556 = vunpack.c.l.b16 %v488
    %v557 = vunpack.c.h.b16 %v488
    %v558 = vunpack.c.l.b16 %v489
    %v559 = vunpack.c.h.b16 %v489
    %v560 = vunpack.c.l.b16 %v490
    %v561 = vunpack.c.h.b16 %v490
    %v562 = vunpack.c.l.b16 %v491
    %v563 = vunpack.c.h.b16 %v491
    %v564 = vunpack.c.l.b16 %v492
    %v565 = vunpack.c.h.b16 %v492
    %v566 = vunpack.c.l.b16 %v493
    %v567 = vunpack.c.h.b16 %v493
    %v568 = vunpack.c.l.b16 %v494
    %v569 = vunpack.c.h.b16 %v494
    %v570 = vunpack.c.l.b16 %v495
    %v571 = vunpack.c.h.b16 %v495
    %v572 = vunpack.c.l.b16 %v496
    %v573 = vunpack.c.h.b16 %v496
    %v574 = vunpack.c.l.b16 %v497
    %v575 = vunpack.c.h.b16 %v497
    %v576 = vunpack.c.l.b16 %v498
    %v577 = vunpack.c.h.b16 %v498
    %v578 = vunpack.c.l.b16 %v499
    %v579 = vunpack.c.h.b16 %v499
    %v580 = vunpack.c.l.b16 %v500
    %v581 = vunpack.c.h.b16 %v500
    %v582 = vunpack.c.l.b16 %v501
    %v583 = vunpack.c.h.b16 %v501
    %v584 = vunpack.c.l.b16 %v502
    %v585 = vunpack.c.h.b16 %v502
    %v586 = vunpack.c.l.b16 %v503
    %v587 = vunpack.c.h.b16 %v503
    %v588 = vunpack.c.l.b16 %v504
    %v589 = vunpack.c.h.b16 %v504
    %v590 = vunpack.c.l.b16 %v505
    %v591 = vunpack.c.h.b16 %v505
    %v592 = vunpack.c.l.b16 %v506
    %v593 = vunpack.c.h.b16 %v506
    %v594 = vunpack.c.l.b16 %v507
    %v595 = vunpack.c.h.b16 %v507
    %v596 = vunpack.c.l.b16 %v508
    %v597 = vunpack.c.h.b16 %v508
    %v598 = vunpack.c.l.b16 %v509
    %v599 = vunpack.c.h.b16 %v509
    %v600 = vunpack.c.l.b16 %v510
    %v601 = vunpack.c.h.b16 %v510
    %v602 = vunpack.c.l.b16 %v511
    %v603 = vunpack.c.h.b16 %v511
    %v604 = vunpack.c.l.b16 %v512
    %v605 = vunpack.c.h.b16 %v512
    %v606 = vunpack.c.l.b16 %v513
    %v607 = vunpack.c.h.b16 %v513
    %v608 = vunpack.c.l.b16 %v514
    %v609 = vunpack.c.h.b16 %v514
    %v610 = vunpack.c.l.b16 %v515
    %v611 = vunpack.c.h.b16 %v515
    %v612 = vpack.c.b16 %v550, %v548
    %v613 = vpack.c.b16 %v551, %v549
    %v614 = vpack.c.b16 %v554, %v552
    %v615 = vpack.c.b16 %v555, %v553
    %v616 = vpack.c.b16 %v558, %v556
    %v617 = vpack.c.b16 %v559, %v557
    %v618 = vpack.c.b16 %v562, %v560
    %v619 = vpack.c.b16 %v563, %v561
    %v620 = vpack.c.b16 %v566, %v564
    %v621 = vpack.c.b16 %v567, %v565
    %v622 = vpack.c.b16 %v570, %v568
    %v623 = vpack.c.b16 %v571, %v569
    %v624 = vpack.c.b16 %v574, %v572
    %v625 = vpack.c.b16 %v575, %v573
    %v626 = vpack.c.b16 %v578, %v576
    %v627 = vpack.c.b16 %v579, %v577
    %v628 = vpack.c.b16 %v582, %v580
    %v629 = vpack.c.b16 %v583, %v581
    %v630 = vpack.c.b16 %v586, %v584
    %v631 = vpack.c.b16 %v587, %v585
    %v632 = vpack.c.b16 %v590, %v588
    %v633 = vpack.c.b16 %v591, %v589
    %v634 = vpack.c.b16 %v594, %v592
    %v635 = vpack.c.b16 %v595, %v593
    %v636 = vpack.c.b16 %v598, %v596
    %v637 = vpack.c.b16 %v599, %v597
    %v638 = vpack.c.b16 %v602, %v600
    %v639 = vpack.c.b16 %v603, %v601
    %v640 = vpack.c.b16 %v606, %v604
    %v641 = vpack.c.b16 %v607, %v605
    %v642 = vpack.c.b16 %v610, %v608
    %v643 = vpack.c.b16 %v611, %v609
    %676 = vmatpush.bf16.msra.mxu0 %v626
    %677 = vmatpush.bf16.msra.mxu0 %v624
    %678 = vmatpush.bf16.msra.mxu0 %v622
    %679 = vmatpush.bf16.msra.mxu0 %v620
    %680 = vmatpush.bf16.msra.mxu0 %v618
    %681 = vmatpush.bf16.msra.mxu0 %v616
    %682 = vmatpush.bf16.msra.mxu0 %v614
    %683 = vmatpush.bf16.msra.mxu0 %v612
    %684 = vmatmul.bf16.gmra.mxu0 %v468
    %v685 = vpop.f32.mrf.mxu0
    %v686 = vadd.f32 0.0, %v685
    %v687 = vpop.f32.mrf.mxu0
    %v688 = vadd.f32 0.0, %v687
    %689 = vmatmul.bf16.gmra.mxu0 %v470
    %v690 = vpop.f32.mrf.mxu0
    %v691 = vadd.f32 0.0, %v690
    %v692 = vpop.f32.mrf.mxu0
    %v693 = vadd.f32 0.0, %v692
    %694 = vmatmul.bf16.gmra.mxu0 %v472
    %v695 = vpop.f32.mrf.mxu0
    %v696 = vadd.f32 0.0, %v695
    %v697 = vpop.f32.mrf.mxu0
    %v698 = vadd.f32 0.0, %v697
    %699 = vmatmul.bf16.gmra.mxu0 %v474
    %v700 = vpop.f32.mrf.mxu0
    %v701 = vadd.f32 0.0, %v700
    %v702 = vpop.f32.mrf.mxu0
    %v703 = vadd.f32 0.0, %v702
    %704 = vmatmul.bf16.gmra.mxu0 %v476
    %v705 = vpop.f32.mrf.mxu0
    %v706 = vadd.f32 0.0, %v705
    %v707 = vpop.f32.mrf.mxu0
    %v708 = vadd.f32 0.0, %v707
    %709 = vmatmul.bf16.gmra.mxu0 %v478
    %v710 = vpop.f32.mrf.mxu0
    %v711 = vadd.f32 0.0, %v710
    %v712 = vpop.f32.mrf.mxu0
    %v713 = vadd.f32 0.0, %v712
    %714 = vmatmul.bf16.gmra.mxu0 %v480
    %v715 = vpop.f32.mrf.mxu0
    %v716 = vadd.f32 0.0, %v715
    %v717 = vpop.f32.mrf.mxu0
    %v718 = vadd.f32 0.0, %v717
    %719 = vmatmul.bf16.gmra.mxu0 %v482
    %v720 = vpop.f32.mrf.mxu0
    %v721 = vadd.f32 0.0, %v720
    %v722 = vpop.f32.mrf.mxu0
    %v723 = vadd.f32 0.0, %v722
    %724 = vdwg.mxu0
    %725 = vmatpush.bf16.msra.mxu0 %v642
    %726 = vmatpush.bf16.msra.mxu0 %v640
    %727 = vmatpush.bf16.msra.mxu0 %v638
    %728 = vmatpush.bf16.msra.mxu0 %v636
    %729 = vmatpush.bf16.msra.mxu0 %v634
    %730 = vmatpush.bf16.msra.mxu0 %v632
    %731 = vmatpush.bf16.msra.mxu0 %v630
    %732 = vmatpush.bf16.msra.mxu0 %v628
    %733 = vmatmul.bf16.gmra.mxu0 %v469
    %v734 = vpop.f32.mrf.mxu0
    %v735 = vadd.f32 %v686, %v734
    %v736 = vpop.f32.mrf.mxu0
    %v737 = vadd.f32 %v688, %v736
    %738 = vmatmul.bf16.gmra.mxu0 %v471
    %v739 = vpop.f32.mrf.mxu0
    %v740 = vadd.f32 %v691, %v739
    %v741 = vpop.f32.mrf.mxu0
    %v742 = vadd.f32 %v693, %v741
    %743 = vmatmul.bf16.gmra.mxu0 %v473
    %v744 = vpop.f32.mrf.mxu0
    %v745 = vadd.f32 %v696, %v744
    %v746 = vpop.f32.mrf.mxu0
    %v747 = vadd.f32 %v698, %v746
    %748 = vmatmul.bf16.gmra.mxu0 %v475
    %v749 = vpop.f32.mrf.mxu0
    %v750 = vadd.f32 %v701, %v749
    %v751 = vpop.f32.mrf.mxu0
    %v752 = vadd.f32 %v703, %v751
    %753 = vmatmul.bf16.gmra.mxu0 %v477
    %v754 = vpop.f32.mrf.mxu0
    %v755 = vadd.f32 %v706, %v754
    %v756 = vpop.f32.mrf.mxu0
    %v757 = vadd.f32 %v708, %v756
    %758 = vmatmul.bf16.gmra.mxu0 %v479
    %v759 = vpop.f32.mrf.mxu0
    %v760 = vadd.f32 %v711, %v759
    %v761 = vpop.f32.mrf.mxu0
    %v762 = vadd.f32 %v713, %v761
    %763 = vmatmul.bf16.gmra.mxu0 %v481
    %v764 = vpop.f32.mrf.mxu0
    %v765 = vadd.f32 %v716, %v764
    %v766 = vpop.f32.mrf.mxu0
    %v767 = vadd.f32 %v718, %v766
    %768 = vmatmul.bf16.gmra.mxu0 %v483
    %v769 = vpop.f32.mrf.mxu0
    %v770 = vadd.f32 %v721, %v769
    %v771 = vpop.f32.mrf.mxu0
    %v772 = vadd.f32 %v723, %v771
    %773 = vdwg.mxu0
    %774 = vmatpush.bf16.msra.mxu0 %v627
    %775 = vmatpush.bf16.msra.mxu0 %v625
    %776 = vmatpush.bf16.msra.mxu0 %v623
    %777 = vmatpush.bf16.msra.mxu0 %v621
    %778 = vmatpush.bf16.msra.mxu0 %v619
    %779 = vmatpush.bf16.msra.mxu0 %v617
    %780 = vmatpush.bf16.msra.mxu0 %v615
    %781 = vmatpush.bf16.msra.mxu0 %v613
    %782 = vmatmul.bf16.gmra.mxu0 %v468
    %v783 = vpop.f32.mrf.mxu0
    %v784 = vadd.f32 0.0, %v783
    %v785 = vpop.f32.mrf.mxu0
    %v786 = vadd.f32 0.0, %v785
    %787 = vmatmul.bf16.gmra.mxu0 %v470
    %v788 = vpop.f32.mrf.mxu0
    %v789 = vadd.f32 0.0, %v788
    %v790 = vpop.f32.mrf.mxu0
    %v791 = vadd.f32 0.0, %v790
    %792 = vmatmul.bf16.gmra.mxu0 %v472
    %v793 = vpop.f32.mrf.mxu0
    %v794 = vadd.f32 0.0, %v793
    %v795 = vpop.f32.mrf.mxu0
    %v796 = vadd.f32 0.0, %v795
    %797 = vmatmul.bf16.gmra.mxu0 %v474
    %v798 = vpop.f32.mrf.mxu0
    %v799 = vadd.f32 0.0, %v798
    %v800 = vpop.f32.mrf.mxu0
    %v801 = vadd.f32 0.0, %v800
    %802 = vmatmul.bf16.gmra.mxu0 %v476
    %v803 = vpop.f32.mrf.mxu0
    %v804 = vadd.f32 0.0, %v803
    %v805 = vpop.f32.mrf.mxu0
    %v806 = vadd.f32 0.0, %v805
    %807 = vmatmul.bf16.gmra.mxu0 %v478
    %v808 = vpop.f32.mrf.mxu0
    %v809 = vadd.f32 0.0, %v808
    %v810 = vpop.f32.mrf.mxu0
    %v811 = vadd.f32 0.0, %v810
    %812 = vmatmul.bf16.gmra.mxu0 %v480
    %v813 = vpop.f32.mrf.mxu0
    %v814 = vadd.f32 0.0, %v813
    %v815 = vpop.f32.mrf.mxu0
    %v816 = vadd.f32 0.0, %v815
    %817 = vmatmul.bf16.gmra.mxu0 %v482
    %v818 = vpop.f32.mrf.mxu0
    %v819 = vadd.f32 0.0, %v818
    %v820 = vpop.f32.mrf.mxu0
    %v821 = vadd.f32 0.0, %v820
    %822 = vdwg.mxu0
    %823 = vmatpush.bf16.msra.mxu0 %v643
    %824 = vmatpush.bf16.msra.mxu0 %v641
    %825 = vmatpush.bf16.msra.mxu0 %v639
    %826 = vmatpush.bf16.msra.mxu0 %v637
    %827 = vmatpush.bf16.msra.mxu0 %v635
    %828 = vmatpush.bf16.msra.mxu0 %v633
    %829 = vmatpush.bf16.msra.mxu0 %v631
    %830 = vmatpush.bf16.msra.mxu0 %v629
    %831 = vmatmul.bf16.gmra.mxu0 %v469
    %v832 = vpop.f32.mrf.mxu0
    %v833 = vadd.f32 %v784, %v832
    %v834 = vpop.f32.mrf.mxu0
    %v835 = vadd.f32 %v786, %v834
    %836 = vmatmul.bf16.gmra.mxu0 %v471
    %v837 = vpop.f32.mrf.mxu0
    %v838 = vadd.f32 %v789, %v837
    %v839 = vpop.f32.mrf.mxu0
    %v840 = vadd.f32 %v791, %v839
    %841 = vmatmul.bf16.gmra.mxu0 %v473
    %v842 = vpop.f32.mrf.mxu0
    %v843 = vadd.f32 %v794, %v842
    %v844 = vpop.f32.mrf.mxu0
    %v845 = vadd.f32 %v796, %v844
    %846 = vmatmul.bf16.gmra.mxu0 %v475
    %v847 = vpop.f32.mrf.mxu0
    %v848 = vadd.f32 %v799, %v847
    %v849 = vpop.f32.mrf.mxu0
    %v850 = vadd.f32 %v801, %v849
    %851 = vmatmul.bf16.gmra.mxu0 %v477
    %v852 = vpop.f32.mrf.mxu0
    %v853 = vadd.f32 %v804, %v852
    %v854 = vpop.f32.mrf.mxu0
    %v855 = vadd.f32 %v806, %v854
    %856 = vmatmul.bf16.gmra.mxu0 %v479
    %v857 = vpop.f32.mrf.mxu0
    %v858 = vadd.f32 %v809, %v857
    %v859 = vpop.f32.mrf.mxu0
    %v860 = vadd.f32 %v811, %v859
    %861 = vmatmul.bf16.gmra.mxu0 %v481
    %v862 = vpop.f32.mrf.mxu0
    %v863 = vadd.f32 %v814, %v862
    %v864 = vpop.f32.mrf.mxu0
    %v865 = vadd.f32 %v816, %v864
    %866 = vmatmul.bf16.gmra.mxu0 %v483
    %v867 = vpop.f32.mrf.mxu0
    %v868 = vadd.f32 %v819, %v867
    %v869 = vpop.f32.mrf.mxu0
    %v870 = vadd.f32 %v821, %v869
    %871 = vdwg.mxu0
    %v872 = vmax.f32 %v735, %v833
    %v873 = vmax.f32 %v737, %v835
    %v874 = vmax.f32 %v740, %v838
    %v875 = vmax.f32 %v742, %v840
    %v876 = vmax.f32 %v745, %v843
    %v877 = vmax.f32 %v747, %v845
    %v878 = vmax.f32 %v750, %v848
    %v879 = vmax.f32 %v752, %v850
    %v880 = vmax.f32 %v755, %v853
    %v881 = vmax.f32 %v757, %v855
    %v882 = vmax.f32 %v760, %v858
    %v883 = vmax.f32 %v762, %v860
    %v884 = vmax.f32 %v765, %v863
    %v885 = vmax.f32 %v767, %v865
    %v886 = vmax.f32 %v770, %v868
    %v887 = vmax.f32 %v772, %v870
    %v888 = vld [vmem:[%s3] sm:$0x1]
    %v890 = vperm.slane %v888, 0
    %v892 = vadd.f32 %v872, %v890
    %v893 = vadd.f32 %v873, %v890
    %v894 = vadd.f32 %v874, %v890
    %v895 = vadd.f32 %v875, %v890
    %v896 = vadd.f32 %v876, %v890
    %v897 = vadd.f32 %v877, %v890
    %v898 = vadd.f32 %v878, %v890
    %v899 = vadd.f32 %v879, %v890
    %v900 = vadd.f32 %v880, %v890
    %v901 = vadd.f32 %v881, %v890
    %v902 = vadd.f32 %v882, %v890
    %v903 = vadd.f32 %v883, %v890
    %v904 = vadd.f32 %v884, %v890
    %v905 = vadd.f32 %v885, %v890
    %v906 = vadd.f32 %v886, %v890
    %v907 = vadd.f32 %v887, %v890
    %v908 = vmax.f32 %v892, 0.0
    %v909 = vmax.f32 %v893, 0.0
    %v910 = vmax.f32 %v894, 0.0
    %v911 = vmax.f32 %v895, 0.0
    %v912 = vmax.f32 %v896, 0.0
    %v913 = vmax.f32 %v897, 0.0
    %v914 = vmax.f32 %v898, 0.0
    %v915 = vmax.f32 %v899, 0.0
    %v916 = vmax.f32 %v900, 0.0
    %v917 = vmax.f32 %v901, 0.0
    %v918 = vmax.f32 %v902, 0.0
    %v919 = vmax.f32 %v903, 0.0
    %v920 = vmax.f32 %v904, 0.0
    %v921 = vmax.f32 %v905, 0.0
    %v922 = vmax.f32 %v906, 0.0
    %v923 = vmax.f32 %v907, 0.0
    %940 = vst [vmem:[#allocation1] ss:$9 sm:$0xff] %v908
    %s941 = scalar_lea.vmem [#allocation1], 1
    %942 = vst [vmem:[%s941] ss:$9 sm:$0xff] %v910
    %s943 = scalar_lea.vmem [#allocation1], 2
    %944 = vst [vmem:[%s943] ss:$9 sm:$0xff] %v912
    %s945 = scalar_lea.vmem [#allocation1], 3
    %946 = vst [vmem:[%s945] ss:$9 sm:$0xff] %v914
    %s947 = scalar_lea.vmem [#allocation1], 4
    %948 = vst [vmem:[%s947] ss:$9 sm:$0xff] %v916
    %s949 = scalar_lea.vmem [#allocation1], 5
    %950 = vst [vmem:[%s949] ss:$9 sm:$0xff] %v918
    %s951 = scalar_lea.vmem [#allocation1], 6
    %952 = vst [vmem:[%s951] ss:$9 sm:$0xff] %v920
    %s953 = scalar_lea.vmem [#allocation1], 7
    %954 = vst [vmem:[%s953] ss:$9 sm:$0xff] %v922
    %v955 = vld [vmem:[#allocation1] sm:$0xff]
    %v956 = vld [vmem:[#allocation1 + $0x9] sm:$0xff]
    %v957 = vld [vmem:[#allocation1 + $0x12] sm:$0xff]
    %v958 = vld [vmem:[#allocation1 + $0x1b] sm:$0xff]
    %v959 = vld [vmem:[#allocation1 + $0x24] sm:$0xff]
    %v960 = vld [vmem:[#allocation1 + $0x2d] sm:$0xff]
    %v961 = vld [vmem:[#allocation1 + $0x36] sm:$0xff]
    %v962 = vld [vmem:[#allocation1 + $0x3f] sm:$0xff]
    %963 = vst [vmem:[#allocation1] ss:$9 sm:$0xff] %v909
    %964 = vst [vmem:[%s941] ss:$9 sm:$0xff] %v911
    %965 = vst [vmem:[%s943] ss:$9 sm:$0xff] %v913
    %966 = vst [vmem:[%s945] ss:$9 sm:$0xff] %v915
    %967 = vst [vmem:[%s947] ss:$9 sm:$0xff] %v917
    %968 = vst [vmem:[%s949] ss:$9 sm:$0xff] %v919
    %969 = vst [vmem:[%s951] ss:$9 sm:$0xff] %v921
    %970 = vst [vmem:[%s953] ss:$9 sm:$0xff] %v923
    %v971 = vld [vmem:[#allocation1] sm:$0xff]
    %v972 = vld [vmem:[#allocation1 + $0x9] sm:$0xff]
    %v973 = vld [vmem:[#allocation1 + $0x12] sm:$0xff]
    %v974 = vld [vmem:[#allocation1 + $0x1b] sm:$0xff]
    %v975 = vld [vmem:[#allocation1 + $0x24] sm:$0xff]
    %v976 = vld [vmem:[#allocation1 + $0x2d] sm:$0xff]
    %v977 = vld [vmem:[#allocation1 + $0x36] sm:$0xff]
    %v978 = vld [vmem:[#allocation1 + $0x3f] sm:$0xff]
    %v995 = vpack.c.bf16 %v955, %v955
    %v996 = vpack.c.bf16 %v956, %v956
    %v997 = vpack.c.bf16 %v957, %v957
    %v998 = vpack.c.bf16 %v958, %v958
    %v999 = vpack.c.bf16 %v959, %v959
    %v1000 = vpack.c.bf16 %v960, %v960
    %v1001 = vpack.c.bf16 %v961, %v961
    %v1002 = vpack.c.bf16 %v962, %v962
    %v1003 = vpack.c.bf16 %v971, %v971
    %v1004 = vpack.c.bf16 %v972, %v972
    %v1005 = vpack.c.bf16 %v973, %v973
    %v1006 = vpack.c.bf16 %v974, %v974
    %v1007 = vpack.c.bf16 %v975, %v975
    %v1008 = vpack.c.bf16 %v976, %v976
    %v1009 = vpack.c.bf16 %v977, %v977
    %v1010 = vpack.c.bf16 %v978, %v978
    %v1011 = vld [vmem:[%s4] sm:$0xf]
    %v1012 = vld [vmem:[%s4 + $0x4] sm:$0xf]
    %v1013 = vld [vmem:[%s4 + $0x8] sm:$0xf]
    %v1014 = vld [vmem:[%s4 + $0xc] sm:$0xf]
    %v1015 = vld [vmem:[%s4 + $0x10] sm:$0xf]
    %v1016 = vld [vmem:[%s4 + $0x14] sm:$0xf]
    %v1017 = vld [vmem:[%s4 + $0x18] sm:$0xf]
    %v1018 = vld [vmem:[%s4 + $0x1c] sm:$0xf]
    %v1019 = vld [vmem:[%s4 + $0x20] sm:$0xf]
    %v1020 = vld [vmem:[%s4 + $0x24] sm:$0xf]
    %v1021 = vld [vmem:[%s4 + $0x28] sm:$0xf]
    %v1022 = vld [vmem:[%s4 + $0x2c] sm:$0xf]
    %v1023 = vld [vmem:[%s4 + $0x30] sm:$0xf]
    %v1024 = vld [vmem:[%s4 + $0x34] sm:$0xf]
    %v1025 = vld [vmem:[%s4 + $0x38] sm:$0xf]
    %v1026 = vld [vmem:[%s4 + $0x3c] sm:$0xf]
    %v1027 = vld [vmem:[%s4 + $0x40] sm:$0xf]
    %v1028 = vld [vmem:[%s4 + $0x44] sm:$0xf]
    %v1029 = vld [vmem:[%s4 + $0x48] sm:$0xf]
    %v1030 = vld [vmem:[%s4 + $0x4c] sm:$0xf]
    %v1031 = vld [vmem:[%s4 + $0x50] sm:$0xf]
    %v1032 = vld [vmem:[%s4 + $0x54] sm:$0xf]
    %v1033 = vld [vmem:[%s4 + $0x58] sm:$0xf]
    %v1034 = vld [vmem:[%s4 + $0x5c] sm:$0xf]
    %v1035 = vld [vmem:[%s4 + $0x60] sm:$0xf]
    %v1036 = vld [vmem:[%s4 + $0x64] sm:$0xf]
    %v1037 = vld [vmem:[%s4 + $0x68] sm:$0xf]
    %v1038 = vld [vmem:[%s4 + $0x6c] sm:$0xf]
    %v1039 = vld [vmem:[%s4 + $0x70] sm:$0xf]
    %v1040 = vld [vmem:[%s4 + $0x74] sm:$0xf]
    %v1041 = vld [vmem:[%s4 + $0x78] sm:$0xf]
    %v1042 = vld [vmem:[%s4 + $0x7c] sm:$0xf]
    %v1043 = vld [vmem:[%s4 + $0x80] sm:$0xf]
    %v1044 = vld [vmem:[%s4 + $0x84] sm:$0xf]
    %v1045 = vld [vmem:[%s4 + $0x88] sm:$0xf]
    %v1046 = vld [vmem:[%s4 + $0x8c] sm:$0xf]
    %v1047 = vld [vmem:[%s4 + $0x90] sm:$0xf]
    %v1048 = vld [vmem:[%s4 + $0x94] sm:$0xf]
    %v1049 = vld [vmem:[%s4 + $0x98] sm:$0xf]
    %v1050 = vld [vmem:[%s4 + $0x9c] sm:$0xf]
    %v1051 = vld [vmem:[%s4 + $0xa0] sm:$0xf]
    %v1052 = vld [vmem:[%s4 + $0xa4] sm:$0xf]
    %v1053 = vld [vmem:[%s4 + $0xa8] sm:$0xf]
    %v1054 = vld [vmem:[%s4 + $0xac] sm:$0xf]
    %v1055 = vld [vmem:[%s4 + $0xb0] sm:$0xf]
    %v1056 = vld [vmem:[%s4 + $0xb4] sm:$0xf]
    %v1057 = vld [vmem:[%s4 + $0xb8] sm:$0xf]
    %v1058 = vld [vmem:[%s4 + $0xbc] sm:$0xf]
    %v1059 = vld [vmem:[%s4 + $0xc0] sm:$0xf]
    %v1060 = vld [vmem:[%s4 + $0xc4] sm:$0xf]
    %v1061 = vld [vmem:[%s4 + $0xc8] sm:$0xf]
    %v1062 = vld [vmem:[%s4 + $0xcc] sm:$0xf]
    %v1063 = vld [vmem:[%s4 + $0xd0] sm:$0xf]
    %v1064 = vld [vmem:[%s4 + $0xd4] sm:$0xf]
    %v1065 = vld [vmem:[%s4 + $0xd8] sm:$0xf]
    %v1066 = vld [vmem:[%s4 + $0xdc] sm:$0xf]
    %v1067 = vld [vmem:[%s4 + $0xe0] sm:$0xf]
    %v1068 = vld [vmem:[%s4 + $0xe4] sm:$0xf]
    %v1069 = vld [vmem:[%s4 + $0xe8] sm:$0xf]
    %v1070 = vld [vmem:[%s4 + $0xec] sm:$0xf]
    %v1071 = vld [vmem:[%s4 + $0xf0] sm:$0xf]
    %v1072 = vld [vmem:[%s4 + $0xf4] sm:$0xf]
    %v1073 = vld [vmem:[%s4 + $0xf8] sm:$0xf]
    %v1074 = vld [vmem:[%s4 + $0xfc] sm:$0xf]
    %v1075 = vld [vmem:[%s4 + $0x100] sm:$0xf]
    %v1076 = vld [vmem:[%s4 + $0x104] sm:$0xf]
    %v1077 = vld [vmem:[%s4 + $0x108] sm:$0xf]
    %v1078 = vld [vmem:[%s4 + $0x10c] sm:$0xf]
    %v1079 = vld [vmem:[%s4 + $0x110] sm:$0xf]
    %v1080 = vld [vmem:[%s4 + $0x114] sm:$0xf]
    %v1081 = vld [vmem:[%s4 + $0x118] sm:$0xf]
    %v1082 = vld [vmem:[%s4 + $0x11c] sm:$0xf]
    %v1083 = vld [vmem:[%s4 + $0x120] sm:$0xf]
    %v1084 = vld [vmem:[%s4 + $0x124] sm:$0xf]
    %v1085 = vld [vmem:[%s4 + $0x128] sm:$0xf]
    %v1086 = vld [vmem:[%s4 + $0x12c] sm:$0xf]
    %v1087 = vld [vmem:[%s4 + $0x130] sm:$0xf]
    %v1088 = vld [vmem:[%s4 + $0x134] sm:$0xf]
    %v1089 = vld [vmem:[%s4 + $0x138] sm:$0xf]
    %v1090 = vld [vmem:[%s4 + $0x13c] sm:$0xf]
    %v1091 = vld [vmem:[%s4 + $0x140] sm:$0xf]
    %v1092 = vld [vmem:[%s4 + $0x144] sm:$0xf]
    %v1093 = vld [vmem:[%s4 + $0x148] sm:$0xf]
    %v1094 = vld [vmem:[%s4 + $0x14c] sm:$0xf]
    %v1095 = vld [vmem:[%s4 + $0x150] sm:$0xf]
    %v1096 = vld [vmem:[%s4 + $0x154] sm:$0xf]
    %v1097 = vld [vmem:[%s4 + $0x158] sm:$0xf]
    %v1098 = vld [vmem:[%s4 + $0x15c] sm:$0xf]
    %v1099 = vld [vmem:[%s4 + $0x160] sm:$0xf]
    %v1100 = vld [vmem:[%s4 + $0x164] sm:$0xf]
    %v1101 = vld [vmem:[%s4 + $0x168] sm:$0xf]
    %v1102 = vld [vmem:[%s4 + $0x16c] sm:$0xf]
    %v1103 = vld [vmem:[%s4 + $0x170] sm:$0xf]
    %v1104 = vld [vmem:[%s4 + $0x174] sm:$0xf]
    %v1105 = vld [vmem:[%s4 + $0x178] sm:$0xf]
    %v1106 = vld [vmem:[%s4 + $0x17c] sm:$0xf]
    %v1107 = vld [vmem:[%s4 + $0x180] sm:$0xf]
    %v1108 = vld [vmem:[%s4 + $0x184] sm:$0xf]
    %v1109 = vld [vmem:[%s4 + $0x188] sm:$0xf]
    %v1110 = vld [vmem:[%s4 + $0x18c] sm:$0xf]
    %v1111 = vld [vmem:[%s4 + $0x190] sm:$0xf]
    %v1112 = vld [vmem:[%s4 + $0x194] sm:$0xf]
    %v1113 = vld [vmem:[%s4 + $0x198] sm:$0xf]
    %v1114 = vld [vmem:[%s4 + $0x19c] sm:$0xf]
    %v1115 = vld [vmem:[%s4 + $0x1a0] sm:$0xf]
    %v1116 = vld [vmem:[%s4 + $0x1a4] sm:$0xf]
    %v1117 = vld [vmem:[%s4 + $0x1a8] sm:$0xf]
    %v1118 = vld [vmem:[%s4 + $0x1ac] sm:$0xf]
    %v1119 = vld [vmem:[%s4 + $0x1b0] sm:$0xf]
    %v1120 = vld [vmem:[%s4 + $0x1b4] sm:$0xf]
    %v1121 = vld [vmem:[%s4 + $0x1b8] sm:$0xf]
    %v1122 = vld [vmem:[%s4 + $0x1bc] sm:$0xf]
    %v1123 = vld [vmem:[%s4 + $0x1c0] sm:$0xf]
    %v1124 = vld [vmem:[%s4 + $0x1c4] sm:$0xf]
    %v1125 = vld [vmem:[%s4 + $0x1c8] sm:$0xf]
    %v1126 = vld [vmem:[%s4 + $0x1cc] sm:$0xf]
    %v1127 = vld [vmem:[%s4 + $0x1d0] sm:$0xf]
    %v1128 = vld [vmem:[%s4 + $0x1d4] sm:$0xf]
    %v1129 = vld [vmem:[%s4 + $0x1d8] sm:$0xf]
    %v1130 = vld [vmem:[%s4 + $0x1dc] sm:$0xf]
    %v1131 = vld [vmem:[%s4 + $0x1e0] sm:$0xf]
    %v1132 = vld [vmem:[%s4 + $0x1e4] sm:$0xf]
    %v1133 = vld [vmem:[%s4 + $0x1e8] sm:$0xf]
    %v1134 = vld [vmem:[%s4 + $0x1ec] sm:$0xf]
    %v1135 = vld [vmem:[%s4 + $0x1f0] sm:$0xf]
    %v1136 = vld [vmem:[%s4 + $0x1f4] sm:$0xf]
    %v1137 = vld [vmem:[%s4 + $0x1f8] sm:$0xf]
    %v1138 = vld [vmem:[%s4 + $0x1fc] sm:$0xf]
    %v1139 = vld [vmem:[%s4 + $0x200] sm:$0xf]
    %v1140 = vld [vmem:[%s4 + $0x204] sm:$0xf]
    %v1141 = vld [vmem:[%s4 + $0x208] sm:$0xf]
    %v1142 = vld [vmem:[%s4 + $0x20c] sm:$0xf]
    %v1143 = vld [vmem:[%s4 + $0x210] sm:$0xf]
    %v1144 = vld [vmem:[%s4 + $0x214] sm:$0xf]
    %v1145 = vld [vmem:[%s4 + $0x218] sm:$0xf]
    %v1146 = vld [vmem:[%s4 + $0x21c] sm:$0xf]
    %v1147 = vld [vmem:[%s4 + $0x220] sm:$0xf]
    %v1148 = vld [vmem:[%s4 + $0x224] sm:$0xf]
    %v1149 = vld [vmem:[%s4 + $0x228] sm:$0xf]
    %v1150 = vld [vmem:[%s4 + $0x22c] sm:$0xf]
    %v1151 = vld [vmem:[%s4 + $0x230] sm:$0xf]
    %v1152 = vld [vmem:[%s4 + $0x234] sm:$0xf]
    %v1153 = vld [vmem:[%s4 + $0x238] sm:$0xf]
    %v1154 = vld [vmem:[%s4 + $0x23c] sm:$0xf]
    %v1155 = vld [vmem:[%s4 + $0x240] sm:$0xf]
    %v1156 = vld [vmem:[%s4 + $0x244] sm:$0xf]
    %v1157 = vld [vmem:[%s4 + $0x248] sm:$0xf]
    %v1158 = vld [vmem:[%s4 + $0x24c] sm:$0xf]
    %v1159 = vld [vmem:[%s4 + $0x250] sm:$0xf]
    %v1160 = vld [vmem:[%s4 + $0x254] sm:$0xf]
    %v1161 = vld [vmem:[%s4 + $0x258] sm:$0xf]
    %v1162 = vld [vmem:[%s4 + $0x25c] sm:$0xf]
    %v1163 = vld [vmem:[%s4 + $0x260] sm:$0xf]
    %v1164 = vld [vmem:[%s4 + $0x264] sm:$0xf]
    %v1165 = vld [vmem:[%s4 + $0x268] sm:$0xf]
    %v1166 = vld [vmem:[%s4 + $0x26c] sm:$0xf]
    %v1167 = vld [vmem:[%s4 + $0x270] sm:$0xf]
    %v1168 = vld [vmem:[%s4 + $0x274] sm:$0xf]
    %v1169 = vld [vmem:[%s4 + $0x278] sm:$0xf]
    %v1170 = vld [vmem:[%s4 + $0x27c] sm:$0xf]
    %v1171 = vld [vmem:[%s4 + $0x280] sm:$0xf]
    %v1172 = vld [vmem:[%s4 + $0x284] sm:$0xf]
    %v1173 = vld [vmem:[%s4 + $0x288] sm:$0xf]
    %v1174 = vld [vmem:[%s4 + $0x28c] sm:$0xf]
    %v1175 = vld [vmem:[%s4 + $0x290] sm:$0xf]
    %v1176 = vld [vmem:[%s4 + $0x294] sm:$0xf]
    %v1177 = vld [vmem:[%s4 + $0x298] sm:$0xf]
    %v1178 = vld [vmem:[%s4 + $0x29c] sm:$0xf]
    %v1179 = vld [vmem:[%s4 + $0x2a0] sm:$0xf]
    %v1180 = vld [vmem:[%s4 + $0x2a4] sm:$0xf]
    %v1181 = vld [vmem:[%s4 + $0x2a8] sm:$0xf]
    %v1182 = vld [vmem:[%s4 + $0x2ac] sm:$0xf]
    %v1183 = vld [vmem:[%s4 + $0x2b0] sm:$0xf]
    %v1184 = vld [vmem:[%s4 + $0x2b4] sm:$0xf]
    %v1185 = vld [vmem:[%s4 + $0x2b8] sm:$0xf]
    %v1186 = vld [vmem:[%s4 + $0x2bc] sm:$0xf]
    %v1187 = vld [vmem:[%s4 + $0x2c0] sm:$0xf]
    %v1188 = vld [vmem:[%s4 + $0x2c4] sm:$0xf]
    %v1189 = vld [vmem:[%s4 + $0x2c8] sm:$0xf]
    %v1190 = vld [vmem:[%s4 + $0x2cc] sm:$0xf]
    %v1191 = vld [vmem:[%s4 + $0x2d0] sm:$0xf]
    %v1192 = vld [vmem:[%s4 + $0x2d4] sm:$0xf]
    %v1193 = vld [vmem:[%s4 + $0x2d8] sm:$0xf]
    %v1194 = vld [vmem:[%s4 + $0x2dc] sm:$0xf]
    %v1195 = vld [vmem:[%s4 + $0x2e0] sm:$0xf]
    %v1196 = vld [vmem:[%s4 + $0x2e4] sm:$0xf]
    %v1197 = vld [vmem:[%s4 + $0x2e8] sm:$0xf]
    %v1198 = vld [vmem:[%s4 + $0x2ec] sm:$0xf]
    %v1199 = vld [vmem:[%s4 + $0x2f0] sm:$0xf]
    %v1200 = vld [vmem:[%s4 + $0x2f4] sm:$0xf]
    %v1201 = vld [vmem:[%s4 + $0x2f8] sm:$0xf]
    %v1202 = vld [vmem:[%s4 + $0x2fc] sm:$0xf]
    %v1203 = vld [vmem:[%s4 + $0x300] sm:$0xf]
    %v1204 = vld [vmem:[%s4 + $0x304] sm:$0xf]
    %v1205 = vld [vmem:[%s4 + $0x308] sm:$0xf]
    %v1206 = vld [vmem:[%s4 + $0x30c] sm:$0xf]
    %v1207 = vld [vmem:[%s4 + $0x310] sm:$0xf]
    %v1208 = vld [vmem:[%s4 + $0x314] sm:$0xf]
    %v1209 = vld [vmem:[%s4 + $0x318] sm:$0xf]
    %v1210 = vld [vmem:[%s4 + $0x31c] sm:$0xf]
    %v1211 = vld [vmem:[%s4 + $0x320] sm:$0xf]
    %v1212 = vld [vmem:[%s4 + $0x324] sm:$0xf]
    %v1213 = vld [vmem:[%s4 + $0x328] sm:$0xf]
    %v1214 = vld [vmem:[%s4 + $0x32c] sm:$0xf]
    %v1215 = vld [vmem:[%s4 + $0x330] sm:$0xf]
    %v1216 = vld [vmem:[%s4 + $0x334] sm:$0xf]
    %v1217 = vld [vmem:[%s4 + $0x338] sm:$0xf]
    %v1218 = vld [vmem:[%s4 + $0x33c] sm:$0xf]
    %v1219 = vld [vmem:[%s4 + $0x340] sm:$0xf]
    %v1220 = vld [vmem:[%s4 + $0x344] sm:$0xf]
    %v1221 = vld [vmem:[%s4 + $0x348] sm:$0xf]
    %v1222 = vld [vmem:[%s4 + $0x34c] sm:$0xf]
    %v1223 = vld [vmem:[%s4 + $0x350] sm:$0xf]
    %v1224 = vld [vmem:[%s4 + $0x354] sm:$0xf]
    %v1225 = vld [vmem:[%s4 + $0x358] sm:$0xf]
    %v1226 = vld [vmem:[%s4 + $0x35c] sm:$0xf]
    %v1227 = vld [vmem:[%s4 + $0x360] sm:$0xf]
    %v1228 = vld [vmem:[%s4 + $0x364] sm:$0xf]
    %v1229 = vld [vmem:[%s4 + $0x368] sm:$0xf]
    %v1230 = vld [vmem:[%s4 + $0x36c] sm:$0xf]
    %v1231 = vld [vmem:[%s4 + $0x370] sm:$0xf]
    %v1232 = vld [vmem:[%s4 + $0x374] sm:$0xf]
    %v1233 = vld [vmem:[%s4 + $0x378] sm:$0xf]
    %v1234 = vld [vmem:[%s4 + $0x37c] sm:$0xf]
    %v1235 = vld [vmem:[%s4 + $0x380] sm:$0xf]
    %v1236 = vld [vmem:[%s4 + $0x384] sm:$0xf]
    %v1237 = vld [vmem:[%s4 + $0x388] sm:$0xf]
    %v1238 = vld [vmem:[%s4 + $0x38c] sm:$0xf]
    %v1239 = vld [vmem:[%s4 + $0x390] sm:$0xf]
    %v1240 = vld [vmem:[%s4 + $0x394] sm:$0xf]
    %v1241 = vld [vmem:[%s4 + $0x398] sm:$0xf]
    %v1242 = vld [vmem:[%s4 + $0x39c] sm:$0xf]
    %v1243 = vld [vmem:[%s4 + $0x3a0] sm:$0xf]
    %v1244 = vld [vmem:[%s4 + $0x3a4] sm:$0xf]
    %v1245 = vld [vmem:[%s4 + $0x3a8] sm:$0xf]
    %v1246 = vld [vmem:[%s4 + $0x3ac] sm:$0xf]
    %v1247 = vld [vmem:[%s4 + $0x3b0] sm:$0xf]
    %v1248 = vld [vmem:[%s4 + $0x3b4] sm:$0xf]
    %v1249 = vld [vmem:[%s4 + $0x3b8] sm:$0xf]
    %v1250 = vld [vmem:[%s4 + $0x3bc] sm:$0xf]
    %v1251 = vld [vmem:[%s4 + $0x3c0] sm:$0xf]
    %v1252 = vld [vmem:[%s4 + $0x3c4] sm:$0xf]
    %v1253 = vld [vmem:[%s4 + $0x3c8] sm:$0xf]
    %v1254 = vld [vmem:[%s4 + $0x3cc] sm:$0xf]
    %v1255 = vld [vmem:[%s4 + $0x3d0] sm:$0xf]
    %v1256 = vld [vmem:[%s4 + $0x3d4] sm:$0xf]
    %v1257 = vld [vmem:[%s4 + $0x3d8] sm:$0xf]
    %v1258 = vld [vmem:[%s4 + $0x3dc] sm:$0xf]
    %v1259 = vld [vmem:[%s4 + $0x3e0] sm:$0xf]
    %v1260 = vld [vmem:[%s4 + $0x3e4] sm:$0xf]
    %v1261 = vld [vmem:[%s4 + $0x3e8] sm:$0xf]
    %v1262 = vld [vmem:[%s4 + $0x3ec] sm:$0xf]
    %v1263 = vld [vmem:[%s4 + $0x3f0] sm:$0xf]
    %v1264 = vld [vmem:[%s4 + $0x3f4] sm:$0xf]
    %v1265 = vld [vmem:[%s4 + $0x3f8] sm:$0xf]
    %v1266 = vld [vmem:[%s4 + $0x3fc] sm:$0xf]
    %v1267 = vld [vmem:[%s5] sm:$0x1]
    %v1269 = vperm.slane %v1267, 0
    %v1527 = vunpack.c.l.b16 %v1011
    %v1528 = vunpack.c.l.b16 %v1012
    %v1529 = vunpack.c.l.b16 %v1013
    %v1530 = vunpack.c.l.b16 %v1014
    %v1531 = vunpack.c.l.b16 %v1015
    %v1532 = vunpack.c.l.b16 %v1016
    %v1533 = vunpack.c.l.b16 %v1017
    %v1534 = vunpack.c.l.b16 %v1018
    %v1535 = vunpack.c.l.b16 %v1019
    %v1536 = vunpack.c.l.b16 %v1020
    %v1537 = vunpack.c.l.b16 %v1021
    %v1538 = vunpack.c.l.b16 %v1022
    %v1539 = vunpack.c.l.b16 %v1023
    %v1540 = vunpack.c.l.b16 %v1024
    %v1541 = vunpack.c.l.b16 %v1025
    %v1542 = vunpack.c.l.b16 %v1026
    %v1543 = vunpack.c.l.b16 %v1027
    %v1544 = vunpack.c.l.b16 %v1028
    %v1545 = vunpack.c.l.b16 %v1029
    %v1546 = vunpack.c.l.b16 %v1030
    %v1547 = vunpack.c.l.b16 %v1031
    %v1548 = vunpack.c.l.b16 %v1032
    %v1549 = vunpack.c.l.b16 %v1033
    %v1550 = vunpack.c.l.b16 %v1034
    %v1551 = vunpack.c.l.b16 %v1035
    %v1552 = vunpack.c.l.b16 %v1036
    %v1553 = vunpack.c.l.b16 %v1037
    %v1554 = vunpack.c.l.b16 %v1038
    %v1555 = vunpack.c.l.b16 %v1039
    %v1556 = vunpack.c.l.b16 %v1040
    %v1557 = vunpack.c.l.b16 %v1041
    %v1558 = vunpack.c.l.b16 %v1042
    %v1559 = vunpack.c.l.b16 %v1043
    %v1560 = vunpack.c.l.b16 %v1044
    %v1561 = vunpack.c.l.b16 %v1045
    %v1562 = vunpack.c.l.b16 %v1046
    %v1563 = vunpack.c.l.b16 %v1047
    %v1564 = vunpack.c.l.b16 %v1048
    %v1565 = vunpack.c.l.b16 %v1049
    %v1566 = vunpack.c.l.b16 %v1050
    %v1567 = vunpack.c.l.b16 %v1051
    %v1568 = vunpack.c.l.b16 %v1052
    %v1569 = vunpack.c.l.b16 %v1053
    %v1570 = vunpack.c.l.b16 %v1054
    %v1571 = vunpack.c.l.b16 %v1055
    %v1572 = vunpack.c.l.b16 %v1056
    %v1573 = vunpack.c.l.b16 %v1057
    %v1574 = vunpack.c.l.b16 %v1058
    %v1575 = vunpack.c.l.b16 %v1059
    %v1576 = vunpack.c.l.b16 %v1060
    %v1577 = vunpack.c.l.b16 %v1061
    %v1578 = vunpack.c.l.b16 %v1062
    %v1579 = vunpack.c.l.b16 %v1063
    %v1580 = vunpack.c.l.b16 %v1064
    %v1581 = vunpack.c.l.b16 %v1065
    %v1582 = vunpack.c.l.b16 %v1066
    %v1583 = vunpack.c.l.b16 %v1067
    %v1584 = vunpack.c.l.b16 %v1068
    %v1585 = vunpack.c.l.b16 %v1069
    %v1586 = vunpack.c.l.b16 %v1070
    %v1587 = vunpack.c.l.b16 %v1071
    %v1588 = vunpack.c.l.b16 %v1072
    %v1589 = vunpack.c.l.b16 %v1073
    %v1590 = vunpack.c.l.b16 %v1074
    %v1591 = vunpack.c.l.b16 %v1075
    %v1592 = vunpack.c.l.b16 %v1076
    %v1593 = vunpack.c.l.b16 %v1077
    %v1594 = vunpack.c.l.b16 %v1078
    %v1595 = vunpack.c.l.b16 %v1079
    %v1596 = vunpack.c.l.b16 %v1080
    %v1597 = vunpack.c.l.b16 %v1081
    %v1598 = vunpack.c.l.b16 %v1082
    %v1599 = vunpack.c.l.b16 %v1083
    %v1600 = vunpack.c.l.b16 %v1084
    %v1601 = vunpack.c.l.b16 %v1085
    %v1602 = vunpack.c.l.b16 %v1086
    %v1603 = vunpack.c.l.b16 %v1087
    %v1604 = vunpack.c.l.b16 %v1088
    %v1605 = vunpack.c.l.b16 %v1089
    %v1606 = vunpack.c.l.b16 %v1090
    %v1607 = vunpack.c.l.b16 %v1091
    %v1608 = vunpack.c.l.b16 %v1092
    %v1609 = vunpack.c.l.b16 %v1093
    %v1610 = vunpack.c.l.b16 %v1094
    %v1611 = vunpack.c.l.b16 %v1095
    %v1612 = vunpack.c.l.b16 %v1096
    %v1613 = vunpack.c.l.b16 %v1097
    %v1614 = vunpack.c.l.b16 %v1098
    %v1615 = vunpack.c.l.b16 %v1099
    %v1616 = vunpack.c.l.b16 %v1100
    %v1617 = vunpack.c.l.b16 %v1101
    %v1618 = vunpack.c.l.b16 %v1102
    %v1619 = vunpack.c.l.b16 %v1103
    %v1620 = vunpack.c.l.b16 %v1104
    %v1621 = vunpack.c.l.b16 %v1105
    %v1622 = vunpack.c.l.b16 %v1106
    %v1623 = vunpack.c.l.b16 %v1107
    %v1624 = vunpack.c.l.b16 %v1108
    %v1625 = vunpack.c.l.b16 %v1109
    %v1626 = vunpack.c.l.b16 %v1110
    %v1627 = vunpack.c.l.b16 %v1111
    %v1628 = vunpack.c.l.b16 %v1112
    %v1629 = vunpack.c.l.b16 %v1113
    %v1630 = vunpack.c.l.b16 %v1114
    %v1631 = vunpack.c.l.b16 %v1115
    %v1632 = vunpack.c.l.b16 %v1116
    %v1633 = vunpack.c.l.b16 %v1117
    %v1634 = vunpack.c.l.b16 %v1118
    %v1635 = vunpack.c.l.b16 %v1119
    %v1636 = vunpack.c.l.b16 %v1120
    %v1637 = vunpack.c.l.b16 %v1121
    %v1638 = vunpack.c.l.b16 %v1122
    %v1639 = vunpack.c.l.b16 %v1123
    %v1640 = vunpack.c.l.b16 %v1124
    %v1641 = vunpack.c.l.b16 %v1125
    %v1642 = vunpack.c.l.b16 %v1126
    %v1643 = vunpack.c.l.b16 %v1127
    %v1644 = vunpack.c.l.b16 %v1128
    %v1645 = vunpack.c.l.b16 %v1129
    %v1646 = vunpack.c.l.b16 %v1130
    %v1647 = vunpack.c.l.b16 %v1131
    %v1648 = vunpack.c.l.b16 %v1132
    %v1649 = vunpack.c.l.b16 %v1133
    %v1650 = vunpack.c.l.b16 %v1134
    %v1651 = vunpack.c.l.b16 %v1135
    %v1652 = vunpack.c.l.b16 %v1136
    %v1653 = vunpack.c.l.b16 %v1137
    %v1654 = vunpack.c.l.b16 %v1138
    %v1655 = vunpack.c.l.b16 %v1139
    %v1656 = vunpack.c.l.b16 %v1140
    %v1657 = vunpack.c.l.b16 %v1141
    %v1658 = vunpack.c.l.b16 %v1142
    %v1659 = vunpack.c.l.b16 %v1143
    %v1660 = vunpack.c.l.b16 %v1144
    %v1661 = vunpack.c.l.b16 %v1145
    %v1662 = vunpack.c.l.b16 %v1146
    %v1663 = vunpack.c.l.b16 %v1147
    %v1664 = vunpack.c.l.b16 %v1148
    %v1665 = vunpack.c.l.b16 %v1149
    %v1666 = vunpack.c.l.b16 %v1150
    %v1667 = vunpack.c.l.b16 %v1151
    %v1668 = vunpack.c.l.b16 %v1152
    %v1669 = vunpack.c.l.b16 %v1153
    %v1670 = vunpack.c.l.b16 %v1154
    %v1671 = vunpack.c.l.b16 %v1155
    %v1672 = vunpack.c.l.b16 %v1156
    %v1673 = vunpack.c.l.b16 %v1157
    %v1674 = vunpack.c.l.b16 %v1158
    %v1675 = vunpack.c.l.b16 %v1159
    %v1676 = vunpack.c.l.b16 %v1160
    %v1677 = vunpack.c.l.b16 %v1161
    %v1678 = vunpack.c.l.b16 %v1162
    %v1679 = vunpack.c.l.b16 %v1163
    %v1680 = vunpack.c.l.b16 %v1164
    %v1681 = vunpack.c.l.b16 %v1165
    %v1682 = vunpack.c.l.b16 %v1166
    %v1683 = vunpack.c.l.b16 %v1167
    %v1684 = vunpack.c.l.b16 %v1168
    %v1685 = vunpack.c.l.b16 %v1169
    %v1686 = vunpack.c.l.b16 %v1170
    %v1687 = vunpack.c.l.b16 %v1171
    %v1688 = vunpack.c.l.b16 %v1172
    %v1689 = vunpack.c.l.b16 %v1173
    %v1690 = vunpack.c.l.b16 %v1174
    %v1691 = vunpack.c.l.b16 %v1175
    %v1692 = vunpack.c.l.b16 %v1176
    %v1693 = vunpack.c.l.b16 %v1177
    %v1694 = vunpack.c.l.b16 %v1178
    %v1695 = vunpack.c.l.b16 %v1179
    %v1696 = vunpack.c.l.b16 %v1180
    %v1697 = vunpack.c.l.b16 %v1181
    %v1698 = vunpack.c.l.b16 %v1182
    %v1699 = vunpack.c.l.b16 %v1183
    %v1700 = vunpack.c.l.b16 %v1184
    %v1701 = vunpack.c.l.b16 %v1185
    %v1702 = vunpack.c.l.b16 %v1186
    %v1703 = vunpack.c.l.b16 %v1187
    %v1704 = vunpack.c.l.b16 %v1188
    %v1705 = vunpack.c.l.b16 %v1189
    %v1706 = vunpack.c.l.b16 %v1190
    %v1707 = vunpack.c.l.b16 %v1191
    %v1708 = vunpack.c.l.b16 %v1192
    %v1709 = vunpack.c.l.b16 %v1193
    %v1710 = vunpack.c.l.b16 %v1194
    %v1711 = vunpack.c.l.b16 %v1195
    %v1712 = vunpack.c.l.b16 %v1196
    %v1713 = vunpack.c.l.b16 %v1197
    %v1714 = vunpack.c.l.b16 %v1198
    %v1715 = vunpack.c.l.b16 %v1199
    %v1716 = vunpack.c.l.b16 %v1200
    %v1717 = vunpack.c.l.b16 %v1201
    %v1718 = vunpack.c.l.b16 %v1202
    %v1719 = vunpack.c.l.b16 %v1203
    %v1720 = vunpack.c.l.b16 %v1204
    %v1721 = vunpack.c.l.b16 %v1205
    %v1722 = vunpack.c.l.b16 %v1206
    %v1723 = vunpack.c.l.b16 %v1207
    %v1724 = vunpack.c.l.b16 %v1208
    %v1725 = vunpack.c.l.b16 %v1209
    %v1726 = vunpack.c.l.b16 %v1210
    %v1727 = vunpack.c.l.b16 %v1211
    %v1728 = vunpack.c.l.b16 %v1212
    %v1729 = vunpack.c.l.b16 %v1213
    %v1730 = vunpack.c.l.b16 %v1214
    %v1731 = vunpack.c.l.b16 %v1215
    %v1732 = vunpack.c.l.b16 %v1216
    %v1733 = vunpack.c.l.b16 %v1217
    %v1734 = vunpack.c.l.b16 %v1218
    %v1735 = vunpack.c.l.b16 %v1219
    %v1736 = vunpack.c.l.b16 %v1220
    %v1737 = vunpack.c.l.b16 %v1221
    %v1738 = vunpack.c.l.b16 %v1222
    %v1739 = vunpack.c.l.b16 %v1223
    %v1740 = vunpack.c.l.b16 %v1224
    %v1741 = vunpack.c.l.b16 %v1225
    %v1742 = vunpack.c.l.b16 %v1226
    %v1743 = vunpack.c.l.b16 %v1227
    %v1744 = vunpack.c.l.b16 %v1228
    %v1745 = vunpack.c.l.b16 %v1229
    %v1746 = vunpack.c.l.b16 %v1230
    %v1747 = vunpack.c.l.b16 %v1231
    %v1748 = vunpack.c.l.b16 %v1232
    %v1749 = vunpack.c.l.b16 %v1233
    %v1750 = vunpack.c.l.b16 %v1234
    %v1751 = vunpack.c.l.b16 %v1235
    %v1752 = vunpack.c.l.b16 %v1236
    %v1753 = vunpack.c.l.b16 %v1237
    %v1754 = vunpack.c.l.b16 %v1238
    %v1755 = vunpack.c.l.b16 %v1239
    %v1756 = vunpack.c.l.b16 %v1240
    %v1757 = vunpack.c.l.b16 %v1241
    %v1758 = vunpack.c.l.b16 %v1242
    %v1759 = vunpack.c.l.b16 %v1243
    %v1760 = vunpack.c.l.b16 %v1244
    %v1761 = vunpack.c.l.b16 %v1245
    %v1762 = vunpack.c.l.b16 %v1246
    %v1763 = vunpack.c.l.b16 %v1247
    %v1764 = vunpack.c.l.b16 %v1248
    %v1765 = vunpack.c.l.b16 %v1249
    %v1766 = vunpack.c.l.b16 %v1250
    %v1767 = vunpack.c.l.b16 %v1251
    %v1768 = vunpack.c.l.b16 %v1252
    %v1769 = vunpack.c.l.b16 %v1253
    %v1770 = vunpack.c.l.b16 %v1254
    %v1771 = vunpack.c.l.b16 %v1255
    %v1772 = vunpack.c.l.b16 %v1256
    %v1773 = vunpack.c.l.b16 %v1257
    %v1774 = vunpack.c.l.b16 %v1258
    %v1775 = vunpack.c.l.b16 %v1259
    %v1776 = vunpack.c.l.b16 %v1260
    %v1777 = vunpack.c.l.b16 %v1261
    %v1778 = vunpack.c.l.b16 %v1262
    %v1779 = vunpack.c.l.b16 %v1263
    %v1780 = vunpack.c.l.b16 %v1264
    %v1781 = vunpack.c.l.b16 %v1265
    %v1782 = vunpack.c.l.b16 %v1266
    %v1783 = vpack.c.b16 %v1528, %v1527
    %v1784 = vpack.c.b16 %v1530, %v1529
    %v1785 = vpack.c.b16 %v1532, %v1531
    %v1786 = vpack.c.b16 %v1534, %v1533
    %v1787 = vpack.c.b16 %v1536, %v1535
    %v1788 = vpack.c.b16 %v1538, %v1537
    %v1789 = vpack.c.b16 %v1540, %v1539
    %v1790 = vpack.c.b16 %v1542, %v1541
    %v1791 = vpack.c.b16 %v1544, %v1543
    %v1792 = vpack.c.b16 %v1546, %v1545
    %v1793 = vpack.c.b16 %v1548, %v1547
    %v1794 = vpack.c.b16 %v1550, %v1549
    %v1795 = vpack.c.b16 %v1552, %v1551
    %v1796 = vpack.c.b16 %v1554, %v1553
    %v1797 = vpack.c.b16 %v1556, %v1555
    %v1798 = vpack.c.b16 %v1558, %v1557
    %v1799 = vpack.c.b16 %v1560, %v1559
    %v1800 = vpack.c.b16 %v1562, %v1561
    %v1801 = vpack.c.b16 %v1564, %v1563
    %v1802 = vpack.c.b16 %v1566, %v1565
    %v1803 = vpack.c.b16 %v1568, %v1567
    %v1804 = vpack.c.b16 %v1570, %v1569
    %v1805 = vpack.c.b16 %v1572, %v1571
    %v1806 = vpack.c.b16 %v1574, %v1573
    %v1807 = vpack.c.b16 %v1576, %v1575
    %v1808 = vpack.c.b16 %v1578, %v1577
    %v1809 = vpack.c.b16 %v1580, %v1579
    %v1810 = vpack.c.b16 %v1582, %v1581
    %v1811 = vpack.c.b16 %v1584, %v1583
    %v1812 = vpack.c.b16 %v1586, %v1585
    %v1813 = vpack.c.b16 %v1588, %v1587
    %v1814 = vpack.c.b16 %v1590, %v1589
    %v1815 = vpack.c.b16 %v1592, %v1591
    %v1816 = vpack.c.b16 %v1594, %v1593
    %v1817 = vpack.c.b16 %v1596, %v1595
    %v1818 = vpack.c.b16 %v1598, %v1597
    %v1819 = vpack.c.b16 %v1600, %v1599
    %v1820 = vpack.c.b16 %v1602, %v1601
    %v1821 = vpack.c.b16 %v1604, %v1603
    %v1822 = vpack.c.b16 %v1606, %v1605
    %v1823 = vpack.c.b16 %v1608, %v1607
    %v1824 = vpack.c.b16 %v1610, %v1609
    %v1825 = vpack.c.b16 %v1612, %v1611
    %v1826 = vpack.c.b16 %v1614, %v1613
    %v1827 = vpack.c.b16 %v1616, %v1615
    %v1828 = vpack.c.b16 %v1618, %v1617
    %v1829 = vpack.c.b16 %v1620, %v1619
    %v1830 = vpack.c.b16 %v1622, %v1621
    %v1831 = vpack.c.b16 %v1624, %v1623
    %v1832 = vpack.c.b16 %v1626, %v1625
    %v1833 = vpack.c.b16 %v1628, %v1627
    %v1834 = vpack.c.b16 %v1630, %v1629
    %v1835 = vpack.c.b16 %v1632, %v1631
    %v1836 = vpack.c.b16 %v1634, %v1633
    %v1837 = vpack.c.b16 %v1636, %v1635
    %v1838 = vpack.c.b16 %v1638, %v1637
    %v1839 = vpack.c.b16 %v1640, %v1639
    %v1840 = vpack.c.b16 %v1642, %v1641
    %v1841 = vpack.c.b16 %v1644, %v1643
    %v1842 = vpack.c.b16 %v1646, %v1645
    %v1843 = vpack.c.b16 %v1648, %v1647
    %v1844 = vpack.c.b16 %v1650, %v1649
    %v1845 = vpack.c.b16 %v1652, %v1651
    %v1846 = vpack.c.b16 %v1654, %v1653
    %v1847 = vpack.c.b16 %v1656, %v1655
    %v1848 = vpack.c.b16 %v1658, %v1657
    %v1849 = vpack.c.b16 %v1660, %v1659
    %v1850 = vpack.c.b16 %v1662, %v1661
    %v1851 = vpack.c.b16 %v1664, %v1663
    %v1852 = vpack.c.b16 %v1666, %v1665
    %v1853 = vpack.c.b16 %v1668, %v1667
    %v1854 = vpack.c.b16 %v1670, %v1669
    %v1855 = vpack.c.b16 %v1672, %v1671
    %v1856 = vpack.c.b16 %v1674, %v1673
    %v1857 = vpack.c.b16 %v1676, %v1675
    %v1858 = vpack.c.b16 %v1678, %v1677
    %v1859 = vpack.c.b16 %v1680, %v1679
    %v1860 = vpack.c.b16 %v1682, %v1681
    %v1861 = vpack.c.b16 %v1684, %v1683
    %v1862 = vpack.c.b16 %v1686, %v1685
    %v1863 = vpack.c.b16 %v1688, %v1687
    %v1864 = vpack.c.b16 %v1690, %v1689
    %v1865 = vpack.c.b16 %v1692, %v1691
    %v1866 = vpack.c.b16 %v1694, %v1693
    %v1867 = vpack.c.b16 %v1696, %v1695
    %v1868 = vpack.c.b16 %v1698, %v1697
    %v1869 = vpack.c.b16 %v1700, %v1699
    %v1870 = vpack.c.b16 %v1702, %v1701
    %v1871 = vpack.c.b16 %v1704, %v1703
    %v1872 = vpack.c.b16 %v1706, %v1705
    %v1873 = vpack.c.b16 %v1708, %v1707
    %v1874 = vpack.c.b16 %v1710, %v1709
    %v1875 = vpack.c.b16 %v1712, %v1711
    %v1876 = vpack.c.b16 %v1714, %v1713
    %v1877 = vpack.c.b16 %v1716, %v1715
    %v1878 = vpack.c.b16 %v1718, %v1717
    %v1879 = vpack.c.b16 %v1720, %v1719
    %v1880 = vpack.c.b16 %v1722, %v1721
    %v1881 = vpack.c.b16 %v1724, %v1723
    %v1882 = vpack.c.b16 %v1726, %v1725
    %v1883 = vpack.c.b16 %v1728, %v1727
    %v1884 = vpack.c.b16 %v1730, %v1729
    %v1885 = vpack.c.b16 %v1732, %v1731
    %v1886 = vpack.c.b16 %v1734, %v1733
    %v1887 = vpack.c.b16 %v1736, %v1735
    %v1888 = vpack.c.b16 %v1738, %v1737
    %v1889 = vpack.c.b16 %v1740, %v1739
    %v1890 = vpack.c.b16 %v1742, %v1741
    %v1891 = vpack.c.b16 %v1744, %v1743
    %v1892 = vpack.c.b16 %v1746, %v1745
    %v1893 = vpack.c.b16 %v1748, %v1747
    %v1894 = vpack.c.b16 %v1750, %v1749
    %v1895 = vpack.c.b16 %v1752, %v1751
    %v1896 = vpack.c.b16 %v1754, %v1753
    %v1897 = vpack.c.b16 %v1756, %v1755
    %v1898 = vpack.c.b16 %v1758, %v1757
    %v1899 = vpack.c.b16 %v1760, %v1759
    %v1900 = vpack.c.b16 %v1762, %v1761
    %v1901 = vpack.c.b16 %v1764, %v1763
    %v1902 = vpack.c.b16 %v1766, %v1765
    %v1903 = vpack.c.b16 %v1768, %v1767
    %v1904 = vpack.c.b16 %v1770, %v1769
    %v1905 = vpack.c.b16 %v1772, %v1771
    %v1906 = vpack.c.b16 %v1774, %v1773
    %v1907 = vpack.c.b16 %v1776, %v1775
    %v1908 = vpack.c.b16 %v1778, %v1777
    %v1909 = vpack.c.b16 %v1780, %v1779
    %v1910 = vpack.c.b16 %v1782, %v1781
    %2039 = vmatpush.bf16.msra.mxu0 %v1790
    %2040 = vmatpush.bf16.msra.mxu0 %v1789
    %2041 = vmatpush.bf16.msra.mxu0 %v1788
    %2042 = vmatpush.bf16.msra.mxu0 %v1787
    %2043 = vmatpush.bf16.msra.mxu0 %v1786
    %2044 = vmatpush.bf16.msra.mxu0 %v1785
    %2045 = vmatpush.bf16.msra.mxu0 %v1784
    %2046 = vmatpush.bf16.msra.mxu0 %v1783
    %2047 = vmatmul.bf16.gmra.mxu0 %v995
    %v2048 = vpop.f32.mrf.mxu0
    %v2049 = vadd.f32 %v1269, %v2048
    %v2050 = vpop.f32.mrf.mxu0
    %2051 = vdwg.mxu0
    %2052 = vmatpush.bf16.msra.mxu0 %v1798
    %2053 = vmatpush.bf16.msra.mxu0 %v1797
    %2054 = vmatpush.bf16.msra.mxu0 %v1796
    %2055 = vmatpush.bf16.msra.mxu0 %v1795
    %2056 = vmatpush.bf16.msra.mxu0 %v1794
    %2057 = vmatpush.bf16.msra.mxu0 %v1793
    %2058 = vmatpush.bf16.msra.mxu0 %v1792
    %2059 = vmatpush.bf16.msra.mxu0 %v1791
    %2060 = vmatmul.bf16.gmra.mxu0 %v996
    %v2061 = vpop.f32.mrf.mxu0
    %v2062 = vadd.f32 %v2049, %v2061
    %v2063 = vpop.f32.mrf.mxu0
    %2064 = vdwg.mxu0
    %2065 = vmatpush.bf16.msra.mxu0 %v1806
    %2066 = vmatpush.bf16.msra.mxu0 %v1805
    %2067 = vmatpush.bf16.msra.mxu0 %v1804
    %2068 = vmatpush.bf16.msra.mxu0 %v1803
    %2069 = vmatpush.bf16.msra.mxu0 %v1802
    %2070 = vmatpush.bf16.msra.mxu0 %v1801
    %2071 = vmatpush.bf16.msra.mxu0 %v1800
    %2072 = vmatpush.bf16.msra.mxu0 %v1799
    %2073 = vmatmul.bf16.gmra.mxu0 %v997
    %v2074 = vpop.f32.mrf.mxu0
    %v2075 = vadd.f32 %v2062, %v2074
    %v2076 = vpop.f32.mrf.mxu0
    %2077 = vdwg.mxu0
    %2078 = vmatpush.bf16.msra.mxu0 %v1814
    %2079 = vmatpush.bf16.msra.mxu0 %v1813
    %2080 = vmatpush.bf16.msra.mxu0 %v1812
    %2081 = vmatpush.bf16.msra.mxu0 %v1811
    %2082 = vmatpush.bf16.msra.mxu0 %v1810
    %2083 = vmatpush.bf16.msra.mxu0 %v1809
    %2084 = vmatpush.bf16.msra.mxu0 %v1808
    %2085 = vmatpush.bf16.msra.mxu0 %v1807
    %2086 = vmatmul.bf16.gmra.mxu0 %v998
    %v2087 = vpop.f32.mrf.mxu0
    %v2088 = vadd.f32 %v2075, %v2087
    %v2089 = vpop.f32.mrf.mxu0
    %2090 = vdwg.mxu0
    %2091 = vmatpush.bf16.msra.mxu0 %v1822
    %2092 = vmatpush.bf16.msra.mxu0 %v1821
    %2093 = vmatpush.bf16.msra.mxu0 %v1820
    %2094 = vmatpush.bf16.msra.mxu0 %v1819
    %2095 = vmatpush.bf16.msra.mxu0 %v1818
    %2096 = vmatpush.bf16.msra.mxu0 %v1817
    %2097 = vmatpush.bf16.msra.mxu0 %v1816
    %2098 = vmatpush.bf16.msra.mxu0 %v1815
    %2099 = vmatmul.bf16.gmra.mxu0 %v999
    %v2100 = vpop.f32.mrf.mxu0
    %v2101 = vadd.f32 %v2088, %v2100
    %v2102 = vpop.f32.mrf.mxu0
    %2103 = vdwg.mxu0
    %2104 = vmatpush.bf16.msra.mxu0 %v1830
    %2105 = vmatpush.bf16.msra.mxu0 %v1829
    %2106 = vmatpush.bf16.msra.mxu0 %v1828
    %2107 = vmatpush.bf16.msra.mxu0 %v1827
    %2108 = vmatpush.bf16.msra.mxu0 %v1826
    %2109 = vmatpush.bf16.msra.mxu0 %v1825
    %2110 = vmatpush.bf16.msra.mxu0 %v1824
    %2111 = vmatpush.bf16.msra.mxu0 %v1823
    %2112 = vmatmul.bf16.gmra.mxu0 %v1000
    %v2113 = vpop.f32.mrf.mxu0
    %v2114 = vadd.f32 %v2101, %v2113
    %v2115 = vpop.f32.mrf.mxu0
    %2116 = vdwg.mxu0
    %2117 = vmatpush.bf16.msra.mxu0 %v1838
    %2118 = vmatpush.bf16.msra.mxu0 %v1837
    %2119 = vmatpush.bf16.msra.mxu0 %v1836
    %2120 = vmatpush.bf16.msra.mxu0 %v1835
    %2121 = vmatpush.bf16.msra.mxu0 %v1834
    %2122 = vmatpush.bf16.msra.mxu0 %v1833
    %2123 = vmatpush.bf16.msra.mxu0 %v1832
    %2124 = vmatpush.bf16.msra.mxu0 %v1831
    %2125 = vmatmul.bf16.gmra.mxu0 %v1001
    %v2126 = vpop.f32.mrf.mxu0
    %v2127 = vadd.f32 %v2114, %v2126
    %v2128 = vpop.f32.mrf.mxu0
    %2129 = vdwg.mxu0
    %2130 = vmatpush.bf16.msra.mxu0 %v1846
    %2131 = vmatpush.bf16.msra.mxu0 %v1845
    %2132 = vmatpush.bf16.msra.mxu0 %v1844
    %2133 = vmatpush.bf16.msra.mxu0 %v1843
    %2134 = vmatpush.bf16.msra.mxu0 %v1842
    %2135 = vmatpush.bf16.msra.mxu0 %v1841
    %2136 = vmatpush.bf16.msra.mxu0 %v1840
    %2137 = vmatpush.bf16.msra.mxu0 %v1839
    %2138 = vmatmul.bf16.gmra.mxu0 %v1002
    %v2139 = vpop.f32.mrf.mxu0
    %v2140 = vadd.f32 %v2127, %v2139
    %v2141 = vpop.f32.mrf.mxu0
    %2142 = vdwg.mxu0
    %2143 = vmatpush.bf16.msra.mxu0 %v1854
    %2144 = vmatpush.bf16.msra.mxu0 %v1853
    %2145 = vmatpush.bf16.msra.mxu0 %v1852
    %2146 = vmatpush.bf16.msra.mxu0 %v1851
    %2147 = vmatpush.bf16.msra.mxu0 %v1850
    %2148 = vmatpush.bf16.msra.mxu0 %v1849
    %2149 = vmatpush.bf16.msra.mxu0 %v1848
    %2150 = vmatpush.bf16.msra.mxu0 %v1847
    %2151 = vmatmul.bf16.gmra.mxu0 %v1003
    %v2152 = vpop.f32.mrf.mxu0
    %v2153 = vadd.f32 %v2140, %v2152
    %v2154 = vpop.f32.mrf.mxu0
    %2155 = vdwg.mxu0
    %2156 = vmatpush.bf16.msra.mxu0 %v1862
    %2157 = vmatpush.bf16.msra.mxu0 %v1861
    %2158 = vmatpush.bf16.msra.mxu0 %v1860
    %2159 = vmatpush.bf16.msra.mxu0 %v1859
    %2160 = vmatpush.bf16.msra.mxu0 %v1858
    %2161 = vmatpush.bf16.msra.mxu0 %v1857
    %2162 = vmatpush.bf16.msra.mxu0 %v1856
    %2163 = vmatpush.bf16.msra.mxu0 %v1855
    %2164 = vmatmul.bf16.gmra.mxu0 %v1004
    %v2165 = vpop.f32.mrf.mxu0
    %v2166 = vadd.f32 %v2153, %v2165
    %v2167 = vpop.f32.mrf.mxu0
    %2168 = vdwg.mxu0
    %2169 = vmatpush.bf16.msra.mxu0 %v1870
    %2170 = vmatpush.bf16.msra.mxu0 %v1869
    %2171 = vmatpush.bf16.msra.mxu0 %v1868
    %2172 = vmatpush.bf16.msra.mxu0 %v1867
    %2173 = vmatpush.bf16.msra.mxu0 %v1866
    %2174 = vmatpush.bf16.msra.mxu0 %v1865
    %2175 = vmatpush.bf16.msra.mxu0 %v1864
    %2176 = vmatpush.bf16.msra.mxu0 %v1863
    %2177 = vmatmul.bf16.gmra.mxu0 %v1005
    %v2178 = vpop.f32.mrf.mxu0
    %v2179 = vadd.f32 %v2166, %v2178
    %v2180 = vpop.f32.mrf.mxu0
    %2181 = vdwg.mxu0
    %2182 = vmatpush.bf16.msra.mxu0 %v1878
    %2183 = vmatpush.bf16.msra.mxu0 %v1877
    %2184 = vmatpush.bf16.msra.mxu0 %v1876
    %2185 = vmatpush.bf16.msra.mxu0 %v1875
    %2186 = vmatpush.bf16.msra.mxu0 %v1874
    %2187 = vmatpush.bf16.msra.mxu0 %v1873
    %2188 = vmatpush.bf16.msra.mxu0 %v1872
    %2189 = vmatpush.bf16.msra.mxu0 %v1871
    %2190 = vmatmul.bf16.gmra.mxu0 %v1006
    %v2191 = vpop.f32.mrf.mxu0
    %v2192 = vadd.f32 %v2179, %v2191
    %v2193 = vpop.f32.mrf.mxu0
    %2194 = vdwg.mxu0
    %2195 = vmatpush.bf16.msra.mxu0 %v1886
    %2196 = vmatpush.bf16.msra.mxu0 %v1885
    %2197 = vmatpush.bf16.msra.mxu0 %v1884
    %2198 = vmatpush.bf16.msra.mxu0 %v1883
    %2199 = vmatpush.bf16.msra.mxu0 %v1882
    %2200 = vmatpush.bf16.msra.mxu0 %v1881
    %2201 = vmatpush.bf16.msra.mxu0 %v1880
    %2202 = vmatpush.bf16.msra.mxu0 %v1879
    %2203 = vmatmul.bf16.gmra.mxu0 %v1007
    %v2204 = vpop.f32.mrf.mxu0
    %v2205 = vadd.f32 %v2192, %v2204
    %v2206 = vpop.f32.mrf.mxu0
    %2207 = vdwg.mxu0
    %2208 = vmatpush.bf16.msra.mxu0 %v1894
    %2209 = vmatpush.bf16.msra.mxu0 %v1893
    %2210 = vmatpush.bf16.msra.mxu0 %v1892
    %2211 = vmatpush.bf16.msra.mxu0 %v1891
    %2212 = vmatpush.bf16.msra.mxu0 %v1890
    %2213 = vmatpush.bf16.msra.mxu0 %v1889
    %2214 = vmatpush.bf16.msra.mxu0 %v1888
    %2215 = vmatpush.bf16.msra.mxu0 %v1887
    %2216 = vmatmul.bf16.gmra.mxu0 %v1008
    %v2217 = vpop.f32.mrf.mxu0
    %v2218 = vadd.f32 %v2205, %v2217
    %v2219 = vpop.f32.mrf.mxu0
    %2220 = vdwg.mxu0
    %2221 = vmatpush.bf16.msra.mxu0 %v1902
    %2222 = vmatpush.bf16.msra.mxu0 %v1901
    %2223 = vmatpush.bf16.msra.mxu0 %v1900
    %2224 = vmatpush.bf16.msra.mxu0 %v1899
    %2225 = vmatpush.bf16.msra.mxu0 %v1898
    %2226 = vmatpush.bf16.msra.mxu0 %v1897
    %2227 = vmatpush.bf16.msra.mxu0 %v1896
    %2228 = vmatpush.bf16.msra.mxu0 %v1895
    %2229 = vmatmul.bf16.gmra.mxu0 %v1009
    %v2230 = vpop.f32.mrf.mxu0
    %v2231 = vadd.f32 %v2218, %v2230
    %v2232 = vpop.f32.mrf.mxu0
    %2233 = vdwg.mxu0
    %2234 = vmatpush.bf16.msra.mxu0 %v1910
    %2235 = vmatpush.bf16.msra.mxu0 %v1909
    %2236 = vmatpush.bf16.msra.mxu0 %v1908
    %2237 = vmatpush.bf16.msra.mxu0 %v1907
    %2238 = vmatpush.bf16.msra.mxu0 %v1906
    %2239 = vmatpush.bf16.msra.mxu0 %v1905
    %2240 = vmatpush.bf16.msra.mxu0 %v1904
    %2241 = vmatpush.bf16.msra.mxu0 %v1903
    %2242 = vmatmul.bf16.gmra.mxu0 %v1010
    %v2243 = vpop.f32.mrf.mxu0
    %v2244 = vadd.f32 %v2231, %v2243
    %v2245 = vpop.f32.mrf.mxu0
    %2246 = vdwg.mxu0
    %v2247 = vmax.f32 %v2244, 0.0
    %v2248 = vpack.c.bf16 %v2247, %v2247
    %v2249 = vld [vmem:[%s6] sm:$0xf]
    %v2250 = vld [vmem:[%s6 + $0x4] sm:$0xf]
    %v2251 = vld [vmem:[%s6 + $0x8] sm:$0xf]
    %v2252 = vld [vmem:[%s6 + $0xc] sm:$0xf]
    %v2253 = vld [vmem:[%s6 + $0x10] sm:$0xf]
    %v2254 = vld [vmem:[%s6 + $0x14] sm:$0xf]
    %v2255 = vld [vmem:[%s6 + $0x18] sm:$0xf]
    %v2256 = vld [vmem:[%s6 + $0x1c] sm:$0xf]
    %v2257 = vld [vmem:[%s7] sm:$0x1]
    %v2259 = vperm.slane %v2257, 0
    %v2269 = vunpack.c.l.b16 %v2249
    %v2270 = vunpack.c.l.b16 %v2250
    %v2271 = vunpack.c.l.b16 %v2251
    %v2272 = vunpack.c.l.b16 %v2252
    %v2273 = vunpack.c.l.b16 %v2253
    %v2274 = vunpack.c.l.b16 %v2254
    %v2275 = vunpack.c.l.b16 %v2255
    %v2276 = vunpack.c.l.b16 %v2256
    %v2277 = vpack.c.b16 %v2270, %v2269
    %v2278 = vpack.c.b16 %v2272, %v2271
    %v2279 = vpack.c.b16 %v2274, %v2273
    %v2280 = vpack.c.b16 %v2276, %v2275
    %v2286 = vsel %vm183, %v2248, 0
    %2288 = vmatpush.bf16.msra.mxu0 0
    %2289 = vmatpush.bf16.msra.mxu0 0
    %2290 = vmatpush.bf16.msra.mxu0 0
    %2291 = vmatpush.bf16.msra.mxu0 0
    %2292 = vmatpush.bf16.msra.mxu0 %v2280
    %2293 = vmatpush.bf16.msra.mxu0 %v2279
    %2294 = vmatpush.bf16.msra.mxu0 %v2278
    %2295 = vmatpush.bf16.msra.mxu0 %v2277
    %2296 = vmatmul.bf16.gmra.mxu0 %v2286
    %v2297 = vpop.f32.mrf.mxu0
    %v2298 = vadd.f32 %v2259, %v2297
    %v2299 = vpop.f32.mrf.mxu0
    %2300 = vdwg.mxu0
    %2301 = vst [vmem:[#allocation2] sm:$0xff] %v2298
    // Predicated region
    $region34: #{tpu_custom_call.1} parent=1 // pred_check
      _
    $region35: #{tpu_custom_call.1} parent=1 // pred_check_branch
      %2303 = sbr.rel (0) target = $region37
    $region36: #{tpu_custom_call.1} parent=1 // pred_region
      %2305 = vsyncadd [#allocation3], 0
      %s2307 = sshll.u32 [#allocation2], 4
      %s2308 = int_to_ptr.vmem [resolvable:$true] %s2307
      %s2309 = sshll.u32 %s8, 4
      %s2310 = int_to_ptr.hbm [resolvable:$true] %s2309
      %2312 = dma.vmem_to_hbm [thread:$0]  %s2308, 128, %s2310, [#allocation3]
    $region37: #{tpu_custom_call.1} parent=1 // pred_fallthru
      _
    // Predicated region
    $region38: #{tpu_custom_call.1} parent=1 // pred_check
      _
    $region39: #{tpu_custom_call.1} parent=1 // pred_check_branch
      %2314 = sbr.rel (0) target = $region41
    $region40: #{tpu_custom_call.1} parent=1 // pred_region
      %2316 = dma.done [#allocation3], 128
    $region41: #{tpu_custom_call.1} parent=1 // pred_fallthru
      _
    %2317 = vsyncpa [#allocation3], 1

</llo_original>
